<compile_context>
chip_gen: v5e
topology: v5e:2x2
jax: 0.10.0
libtpu: 0.0.40
codegen_flags: <defaults>
</compile_context>

<pallas_src>
import numpy as np
import jax
import jax.numpy as jnp
from jax import lax
from jax.experimental import pallas as pl
from jax.experimental.pallas import tpu as pltpu

_N_CORES = 2  # v7x has 2 TensorCores; a size-2 "parallel" axis is harmless on v5e/v6e.


def _round_up(x, m):
    return ((x + m - 1) // m) * m


def _cdiv(a, b):
    return -(-a // b)


def _make_accum_kernel(n_rows, tile_rows, steps_per_core):
    """Phase-1 kernel: per-core class sums & counts, streamed over batch tiles."""

    def kernel(tgt_ref, reps_ref, sums_out_ref, counts_out_ref, sums_ref, counts_ref):
        core = pl.program_id(0)
        step = pl.program_id(1)

        @pl.when(step == 0)
        def _():
            sums_ref[...] = jnp.zeros_like(sums_ref)
            counts_ref[...] = jnp.zeros_like(counts_ref)

        f_pad = sums_ref.shape[0]

        # Logical (unclamped) tile index -> static row-validity mask.  Rows past
        # n_rows (ragged last tile, or a duplicate clamped tile on the second
        # core) are zeroed in BOTH the reps tile and the one-hot, so edge blocks
        # with unspecified VMEM contents contribute exactly zero.
        t_logical = core * steps_per_core + step
        row0 = t_logical * tile_rows

        col_ids = lax.broadcasted_iota(jnp.int32, (1, tile_rows), 1)
        col_valid = (col_ids + row0) < n_rows                        # (1, TN) bool

        row_ids = lax.broadcasted_iota(jnp.int32, (tile_rows, 1), 0)
        row_valid = (row_ids + row0) < n_rows                        # (TN, 1) bool
        reps = jnp.where(row_valid, reps_ref[...], 0.0)              # (TN, D)

        tgt = tgt_ref[...]                                           # (1, TN) int32
        class_ids = lax.broadcasted_iota(jnp.int32, (f_pad, tile_rows), 0)
        onehot = jnp.logical_and(class_ids == tgt, col_valid).astype(jnp.float32)

        sums_ref[...] += jnp.dot(onehot, reps,
                                 preferred_element_type=jnp.float32)  # (F_pad, D)
        counts_ref[...] += jnp.sum(onehot, axis=1, keepdims=True)     # (F_pad, 1)

        @pl.when(step == pl.num_programs(1) - 1)
        def _():
            sums_out_ref[...] = sums_ref[...]
            counts_out_ref[...] = counts_ref[...]

    return kernel


def _epilogue_kernel(sums_ref, counts_ref, coarse_col_ref, coarse_row_ref, out_ref):
    """Phase-2 kernel: combine per-core partials, pdist / tree-dist, Pearson corr."""
    f_pad = coarse_col_ref.shape[0]
    n_parts = sums_ref.shape[0] // f_pad

    sums = sums_ref[0:f_pad, :]
    counts = counts_ref[0:f_pad, :]
    for p in range(1, n_parts):                      # static loop (n_parts == 2)
        sums = sums + sums_ref[p * f_pad:(p + 1) * f_pad, :]
        counts = counts + counts_ref[p * f_pad:(p + 1) * f_pad, :]

    inv_counts = 1.0 / jnp.maximum(counts, 1.0)      # one reciprocal per class
    means = sums * inv_counts                        # (F_pad, D)

    # Direct-difference pairwise L2 (exact; avoids Gram-identity cancellation).
    diff = means[:, None, :] - means[None, :, :]     # (F_pad, F_pad, D)
    pdist = jnp.sqrt(jnp.sum(diff * diff, axis=-1))  # (F_pad, F_pad)

    # Tree distance: 2 if same coarse parent else 4 (two_level_dT).
    same_coarse = coarse_col_ref[...] == coarse_row_ref[...]
    tdist = jnp.where(same_coarse, jnp.float32(2.0), jnp.float32(4.0))

    # Valid pairs: strict upper triangle, both classes present in the batch.
    row_i = lax.broadcasted_iota(jnp.int32, (f_pad, f_pad), 0)
    col_j = lax.broadcasted_iota(jnp.int32, (f_pad, f_pad), 1)
    eye = (row_i == col_j).astype(jnp.float32)
    present_col = (counts > 0.5).astype(jnp.float32)                    # (F_pad, 1)
    present_row = jnp.sum(present_col * eye, axis=0, keepdims=True)     # (1, F_pad)
    triu = (col_j > row_i).astype(jnp.float32)
    valid = triu * present_col * present_row

    # Pearson correlation over valid pairs.
    n = jnp.sum(valid, keepdims=True)                                   # (1, 1)
    inv_n = 1.0 / jnp.maximum(n, 1.0)
    mx = jnp.sum(pdist * valid, keepdims=True) * inv_n
    my = jnp.sum(tdist * valid, keepdims=True) * inv_n
    dx = (pdist - mx) * valid
    dy = (tdist - my) * valid
    cov = jnp.sum(dx * dy, keepdims=True)
    vx = jnp.sum(dx * dx, keepdims=True)
    vy = jnp.sum(dy * dy, keepdims=True)
    corr = cov * lax.rsqrt(vx * vy)
    res = 1.0 - corr
    out_ref[...] = jnp.where(jnp.isnan(res), jnp.ones_like(res), res)   # NaN -> 1


def cpcc_loss(representations, target_fine, coarse_map, num_fine, *, block_n=2048):
    """CPCC loss (layers=['coarse'], l2) via two Pallas TPU kernels."""
    reps = jnp.asarray(representations, jnp.float32)
    N, D = reps.shape
    F = int(num_fine)
    F_pad = _round_up(F, 8)                       # sublane-aligned class axis

    # Batch-tile rows: multiple of 128 (lane dim of the (1, TN) targets tile),
    # no larger than the batch, and capped so the double-buffered reps tile
    # stays under ~half of v7x's 32 MiB scoped-VMEM default.
    TN = _round_up(block_n, 128)
    tn_vmem_cap = max(128, ((16 * 2**20) // (2 * D * 4)) // 128 * 128)
    tn_batch_cap = max(128, (N // 128) * 128)
    TN = min(TN, tn_vmem_cap, tn_batch_cap)

    n_tiles = _cdiv(N, TN)
    n_steps = _cdiv(n_tiles, _N_CORES)

    tgt = jnp.asarray(target_fine, jnp.int32).reshape(1, N)
    coarse = jnp.pad(jnp.asarray(coarse_map, jnp.int32), (0, F_pad - F),
                     constant_values=-1)          # -1: padding classes never match
    coarse_col = coarse.reshape(F_pad, 1)
    coarse_row = coarse.reshape(1, F_pad)

    # Clamp the tile index so every DMA stays in-bounds; the kernel masks any
    # duplicated / ragged rows via the *unclamped* logical index.
    def tile_idx(c, i):
        return jnp.minimum(c * n_steps + i, n_tiles - 1)

    vmem_need = (2 * TN * D * 4                    # double-buffered reps tiles
                 + 2 * TN * 4                      # double-buffered target tiles
                 + 2 * F_pad * (D + 1) * 4         # sums/counts scratch
                 + 4 * F_pad * (D + 1) * 4)        # partial-sum output buffers
    vmem_limit = int(min(48 * 2**20, max(32 * 2**20, 2 * vmem_need)))

    sums_p, counts_p = pl.pallas_call(
        _make_accum_kernel(N, TN, n_steps),
        out_shape=(jax.ShapeDtypeStruct((_N_CORES * F_pad, D), jnp.float32),
                   jax.ShapeDtypeStruct((_N_CORES * F_pad, 1), jnp.float32)),
        grid_spec=pltpu.PrefetchScalarGridSpec(
            num_scalar_prefetch=0,
            grid=(_N_CORES, n_steps),
            in_specs=[
                pl.BlockSpec((1, TN), lambda c, i: (0, tile_idx(c, i))),   # targets
                pl.BlockSpec((TN, D), lambda c, i: (tile_idx(c, i), 0)),   # reps (D unpadded)
            ],
            out_specs=[
                pl.BlockSpec((F_pad, D), lambda c, i: (c, 0)),             # per-core sums
                pl.BlockSpec((F_pad, 1), lambda c, i: (c, 0)),             # per-core counts
            ],
            scratch_shapes=[
                pltpu.VMEM((F_pad, D), jnp.float32),
                pltpu.VMEM((F_pad, 1), jnp.float32),
            ],
        ),
        compiler_params=pltpu.CompilerParams(
            dimension_semantics=("parallel", "arbitrary"),   # core split x N-reduction
            vmem_limit_bytes=vmem_limit,
        ),
        cost_estimate=pl.CostEstimate(
            flops=2 * F_pad * N * D,
            transcendentals=0,
            bytes_accessed=N * D * 4 + N * 4 + _N_CORES * F_pad * (D + 1) * 4,
        ),
    )(tgt, reps)

    out = pl.pallas_call(
        _epilogue_kernel,
        out_shape=jax.ShapeDtypeStruct((1, 1), jnp.float32),
        grid_spec=pltpu.PrefetchScalarGridSpec(
            num_scalar_prefetch=0,
            grid=(1,),
            in_specs=[
                pl.BlockSpec((_N_CORES * F_pad, D), lambda i: (0, 0)),
                pl.BlockSpec((_N_CORES * F_pad, 1), lambda i: (0, 0)),
                pl.BlockSpec((F_pad, 1), lambda i: (0, 0)),
                pl.BlockSpec((1, F_pad), lambda i: (0, 0)),
            ],
            out_specs=pl.BlockSpec((1, 1), lambda i: (0, 0)),
        ),
    )(sums_p, counts_p, coarse_col, coarse_row)
    return out[0, 0]


def cpcc_reference(reps, target, coarse_map):
    """NumPy reference mirroring the PyTorch forward (l2 + two_level_dT)."""
    reps = np.asarray(reps, np.float64)
    target = np.asarray(target)
    coarse_map = np.asarray(coarse_map)
    all_fine = np.unique(target)
    means = np.stack([reps[target == t].mean(axis=0) for t in all_fine], 0)
    pd, td = [], []
    C = len(all_fine)
    for i in range(C):
        for j in range(i + 1, C):
            pd.append(np.linalg.norm(means[i] - means[j]))
            td.append(2.0 if coarse_map[all_fine[i]] == coarse_map[all_fine[j]] else 4.0)
    pd = np.asarray(pd)
    td = np.asarray(td)
    corr = np.corrcoef(np.stack([pd, td], 0))[0, 1]
    res = 1.0 - corr
    return 1.0 if np.isnan(res) else res


if __name__ == "__main__":
    # Small synthetic setup: 8 fine classes, 4 coarse parents (fine // 2).
    NUM_FINE = 8
    COARSE_MAP = np.array([0, 0, 1, 1, 2, 2, 3, 3], dtype=np.int32)
    D = 32

    fn = jax.jit(cpcc_loss, static_argnums=(3,), static_argnames=("block_n",))

    key = jax.random.PRNGKey(0)
    # (batch N, block_n): covers multi-tile streaming on both cores, a ragged
    # edge tile, a batch-capped TN, and a duplicate (clamped) tile that must
    # be fully masked out.
    configs = [(421, 128), (421, 2048), (300, 128)]
    for N, bn in configs:
        key, k_rep, k_tgt = jax.random.split(key, 3)
        representations = jax.random.normal(k_rep, (N, D), dtype=jnp.float32)
        target_fine = jax.random.randint(k_tgt, (N,), 0, NUM_FINE, dtype=jnp.int32)

        loss = fn(representations, target_fine, jnp.asarray(COARSE_MAP), NUM_FINE,
                  block_n=bn)
        loss = float(jax.block_until_ready(loss))

        ref = cpcc_reference(np.asarray(representations), np.asarray(target_fine),
                             COARSE_MAP)
        assert np.isfinite(loss), f"non-finite loss {loss} (N={N}, block_n={bn})"
        assert abs(loss - float(ref)) < 2e-3, \
            f"mismatch (N={N}, block_n={bn}): kernel={loss} ref={ref}"
    print("KERNEL_OK")
</pallas_src>

<mosaic_0001>
module attributes {stable_mosaic.version = 11 : i64} {
  func.func @_epilogue_kernel(%arg0: i32, %arg1: memref<16x32xf32, #tpu.memory_space<vmem>>, %arg2: memref<16x1xf32, #tpu.memory_space<vmem>>, %arg3: memref<8x1xi32, #tpu.memory_space<vmem>>, %arg4: memref<1x8xi32, #tpu.memory_space<vmem>>, %arg5: memref<1x1xf32, #tpu.memory_space<vmem>>) attributes {dimension_semantics = [#tpu.dimension_semantics<arbitrary>], iteration_bounds = array<i64: 1>, scalar_prefetch = 0 : i64, scratch_operands = 0 : i64, tpu.core_type = #tpu.core_type<tc>, window_params = [{pipeline_mode = #tpu.pipeline_mode<synchronous>, transform_indices = @transform_0, window_bounds = array<i64: 16, 32>}, {pipeline_mode = #tpu.pipeline_mode<synchronous>, transform_indices = @transform_1, window_bounds = array<i64: 16, 1>}, {pipeline_mode = #tpu.pipeline_mode<synchronous>, transform_indices = @transform_2, window_bounds = array<i64: 8, 1>}, {pipeline_mode = #tpu.pipeline_mode<synchronous>, transform_indices = @transform_3, window_bounds = array<i64: 1, 8>}, {pipeline_mode = #tpu.pipeline_mode<synchronous>, transform_indices = @transform_4, window_bounds = array<i64: 1, 1>}]} {
    %c0 = arith.constant 0 : index
    %c0_0 = arith.constant 0 : index
    %0 = vector.load %arg1[%c0, %c0_0] : memref<16x32xf32, #tpu.memory_space<vmem>>, vector<8x32xf32>
    %c0_1 = arith.constant 0 : index
    %c0_2 = arith.constant 0 : index
    %1 = vector.load %arg2[%c0_1, %c0_2] : memref<16x1xf32, #tpu.memory_space<vmem>>, vector<8x1xf32>
    %c8 = arith.constant 8 : index
    %c0_3 = arith.constant 0 : index
    %2 = vector.load %arg1[%c8, %c0_3] : memref<16x32xf32, #tpu.memory_space<vmem>>, vector<8x32xf32>
    %3 = arith.addf %0, %2 : vector<8x32xf32>
    %c8_4 = arith.constant 8 : index
    %c0_5 = arith.constant 0 : index
    %4 = vector.load %arg2[%c8_4, %c0_5] : memref<16x1xf32, #tpu.memory_space<vmem>>, vector<8x1xf32>
    %5 = arith.addf %1, %4 : vector<8x1xf32>
    %cst = arith.constant 1.000000e+00 : f32
    %6 = vector.broadcast %cst : f32 to vector<8x1xf32>
    %7 = arith.maximumf %5, %6 : vector<8x1xf32>
    %cst_6 = arith.constant 1.000000e+00 : f32
    %8 = vector.broadcast %cst_6 : f32 to vector<8x1xf32>
    %9 = arith.divf %8, %7 : vector<8x1xf32>
    %10 = vector.broadcast %9 : vector<8x1xf32> to vector<8x32xf32>
    %11 = arith.mulf %3, %10 : vector<8x32xf32>
    %12 = vector.shape_cast %11 : vector<8x32xf32> to vector<8x1x32xf32>
    %13 = vector.shape_cast %11 : vector<8x32xf32> to vector<1x8x32xf32>
    %14 = vector.broadcast %12 : vector<8x1x32xf32> to vector<8x8x32xf32>
    %15 = vector.broadcast %13 : vector<1x8x32xf32> to vector<8x8x32xf32>
    %16 = arith.subf %14, %15 : vector<8x8x32xf32>
    %17 = arith.mulf %16, %16 : vector<8x8x32xf32>
    %cst_7 = arith.constant dense<0.000000e+00> : vector<8x8xf32>
    %18 = vector.multi_reduction <add>, %17, %cst_7 [2] : vector<8x8x32xf32> to vector<8x8xf32>
    %19 = math.sqrt %18 : vector<8x8xf32>
    %c0_8 = arith.constant 0 : index
    %c0_9 = arith.constant 0 : index
    %20 = vector.load %arg3[%c0_8, %c0_9] : memref<8x1xi32, #tpu.memory_space<vmem>>, vector<8x1xi32>
    %c0_10 = arith.constant 0 : index
    %c0_11 = arith.constant 0 : index
    %21 = vector.load %arg4[%c0_10, %c0_11] : memref<1x8xi32, #tpu.memory_space<vmem>>, vector<1x8xi32>
    %22 = vector.broadcast %20 : vector<8x1xi32> to vector<8x8xi32>
    %23 = vector.broadcast %21 : vector<1x8xi32> to vector<8x8xi32>
    %24 = arith.cmpi eq, %22, %23 : vector<8x8xi32>
    %cst_12 = arith.constant 2.000000e+00 : f32
    %cst_13 = arith.constant 4.000000e+00 : f32
    %25 = vector.broadcast %cst_12 : f32 to vector<8x8xf32>
    %26 = vector.broadcast %cst_13 : f32 to vector<8x8xf32>
    %27 = arith.select %24, %25, %26 : vector<8x8xi1>, vector<8x8xf32>
    %28 = tpu.iota {dimensions = array<i32: 0>} : vector<8x8xi32>
    %29 = tpu.iota {dimensions = array<i32: 1>} : vector<8x8xi32>
    %30 = arith.cmpi eq, %28, %29 : vector<8x8xi32>
    %31 = arith.extui %30 : vector<8x8xi1> to vector<8x8xi32>
    %32 = arith.sitofp %31 : vector<8x8xi32> to vector<8x8xf32>
    %cst_14 = arith.constant 5.000000e-01 : f32
    %33 = vector.broadcast %cst_14 : f32 to vector<8x1xf32>
    %34 = arith.cmpf ogt, %5, %33 : vector<8x1xf32>
    %35 = arith.extui %34 : vector<8x1xi1> to vector<8x1xi32>
    %36 = arith.sitofp %35 : vector<8x1xi32> to vector<8x1xf32>
    %37 = vector.broadcast %36 : vector<8x1xf32> to vector<8x8xf32>
    %38 = arith.mulf %37, %32 : vector<8x8xf32>
    %cst_15 = arith.constant dense<0.000000e+00> : vector<8xf32>
    %39 = vector.multi_reduction <add>, %38, %cst_15 [0] : vector<8x8xf32> to vector<8xf32>
    %40 = vector.shape_cast %39 : vector<8xf32> to vector<1x8xf32>
    %41 = arith.cmpi sgt, %29, %28 : vector<8x8xi32>
    %42 = arith.extui %41 : vector<8x8xi1> to vector<8x8xi32>
    %43 = arith.sitofp %42 : vector<8x8xi32> to vector<8x8xf32>
    %44 = vector.broadcast %36 : vector<8x1xf32> to vector<8x8xf32>
    %45 = arith.mulf %43, %44 : vector<8x8xf32>
    %46 = vector.broadcast %40 : vector<1x8xf32> to vector<8x8xf32>
    %47 = arith.mulf %45, %46 : vector<8x8xf32>
    %48 = vector.shape_cast %47 : vector<8x8xf32> to vector<1x8x8xf32>
    %cst_16 = arith.constant dense<0.000000e+00> : vector<1xf32>
    %49 = vector.multi_reduction <add>, %48, %cst_16 [1, 2] : vector<1x8x8xf32> to vector<1xf32>
    %50 = vector.shape_cast %49 : vector<1xf32> to vector<1x1x1xf32>
    %51 = vector.extract %50[0, 0, 0] : f32 from vector<1x1x1xf32>
    %52 = vector.broadcast %51 : f32 to vector<1x1xf32>
    %cst_17 = arith.constant 1.000000e+00 : f32
    %53 = vector.broadcast %cst_17 : f32 to vector<1x1xf32>
    %54 = arith.maximumf %52, %53 : vector<1x1xf32>
    %cst_18 = arith.constant 1.000000e+00 : f32
    %55 = vector.broadcast %cst_18 : f32 to vector<1x1xf32>
    %56 = arith.divf %55, %54 : vector<1x1xf32>
    %57 = arith.mulf %19, %47 : vector<8x8xf32>
    %58 = vector.shape_cast %57 : vector<8x8xf32> to vector<1x8x8xf32>
    %cst_19 = arith.constant dense<0.000000e+00> : vector<1xf32>
    %59 = vector.multi_reduction <add>, %58, %cst_19 [1, 2] : vector<1x8x8xf32> to vector<1xf32>
    %60 = vector.shape_cast %59 : vector<1xf32> to vector<1x1x1xf32>
    %61 = vector.extract %60[0, 0, 0] : f32 from vector<1x1x1xf32>
    %62 = vector.broadcast %61 : f32 to vector<1x1xf32>
    %63 = arith.mulf %62, %56 : vector<1x1xf32>
    %64 = arith.mulf %27, %47 : vector<8x8xf32>
    %65 = vector.shape_cast %64 : vector<8x8xf32> to vector<1x8x8xf32>
    %cst_20 = arith.constant dense<0.000000e+00> : vector<1xf32>
    %66 = vector.multi_reduction <add>, %65, %cst_20 [1, 2] : vector<1x8x8xf32> to vector<1xf32>
    %67 = vector.shape_cast %66 : vector<1xf32> to vector<1x1x1xf32>
    %68 = vector.extract %67[0, 0, 0] : f32 from vector<1x1x1xf32>
    %69 = vector.broadcast %68 : f32 to vector<1x1xf32>
    %70 = arith.mulf %69, %56 : vector<1x1xf32>
    %71 = vector.broadcast %63 : vector<1x1xf32> to vector<8x8xf32>
    %72 = arith.subf %19, %71 : vector<8x8xf32>
    %73 = arith.mulf %72, %47 : vector<8x8xf32>
    %74 = vector.broadcast %70 : vector<1x1xf32> to vector<8x8xf32>
    %75 = arith.subf %27, %74 : vector<8x8xf32>
    %76 = arith.mulf %75, %47 : vector<8x8xf32>
    %77 = arith.mulf %73, %76 : vector<8x8xf32>
    %78 = vector.shape_cast %77 : vector<8x8xf32> to vector<1x8x8xf32>
    %cst_21 = arith.constant dense<0.000000e+00> : vector<1xf32>
    %79 = vector.multi_reduction <add>, %78, %cst_21 [1, 2] : vector<1x8x8xf32> to vector<1xf32>
    %80 = vector.shape_cast %79 : vector<1xf32> to vector<1x1x1xf32>
    %81 = vector.extract %80[0, 0, 0] : f32 from vector<1x1x1xf32>
    %82 = vector.broadcast %81 : f32 to vector<1x1xf32>
    %83 = arith.mulf %73, %73 : vector<8x8xf32>
    %84 = vector.shape_cast %83 : vector<8x8xf32> to vector<1x8x8xf32>
    %cst_22 = arith.constant dense<0.000000e+00> : vector<1xf32>
    %85 = vector.multi_reduction <add>, %84, %cst_22 [1, 2] : vector<1x8x8xf32> to vector<1xf32>
    %86 = vector.shape_cast %85 : vector<1xf32> to vector<1x1x1xf32>
    %87 = vector.extract %86[0, 0, 0] : f32 from vector<1x1x1xf32>
    %88 = vector.broadcast %87 : f32 to vector<1x1xf32>
    %89 = arith.mulf %76, %76 : vector<8x8xf32>
    %90 = vector.shape_cast %89 : vector<8x8xf32> to vector<1x8x8xf32>
    %cst_23 = arith.constant dense<0.000000e+00> : vector<1xf32>
    %91 = vector.multi_reduction <add>, %90, %cst_23 [1, 2] : vector<1x8x8xf32> to vector<1xf32>
    %92 = vector.shape_cast %91 : vector<1xf32> to vector<1x1x1xf32>
    %93 = vector.extract %92[0, 0, 0] : f32 from vector<1x1x1xf32>
    %94 = vector.broadcast %93 : f32 to vector<1x1xf32>
    %95 = arith.mulf %88, %94 : vector<1x1xf32>
    %96 = math.rsqrt %95 : vector<1x1xf32>
    %97 = arith.mulf %82, %96 : vector<1x1xf32>
    %cst_24 = arith.constant 1.000000e+00 : f32
    %98 = vector.broadcast %cst_24 : f32 to vector<1x1xf32>
    %99 = arith.subf %98, %97 : vector<1x1xf32>
    %100 = arith.cmpf one, %99, %99 : vector<1x1xf32>
    %cst_25 = arith.constant 1.000000e+00 : f32
    %101 = vector.broadcast %cst_25 : f32 to vector<1x1xf32>
    %102 = arith.select %100, %101, %99 : vector<1x1xi1>, vector<1x1xf32>
    %c0_26 = arith.constant 0 : index
    %c0_27 = arith.constant 0 : index
    %103 = vector.load %arg5[%c0_26, %c0_27] : memref<1x1xf32, #tpu.memory_space<vmem>>, vector<1x1xf32>
    tpu.vector_store %arg5[%c0_26, %c0_27], %102 {strides = array<i32>} : memref<1x1xf32, #tpu.memory_space<vmem>>, vector<1x1xf32>,
    return
  }
  func.func @transform_0(%arg0: i32) -> (i32, i32) {
    %c0_i32 = arith.constant 0 : i32
    %c0_i32_0 = arith.constant 0 : i32
    %c0_i32_1 = arith.constant 0 : i32
    return %c0_i32, %c0_i32_0 : i32, i32
  }
  func.func @transform_1(%arg0: i32) -> (i32, i32) {
    %c0_i32 = arith.constant 0 : i32
    %c0_i32_0 = arith.constant 0 : i32
    %c0_i32_1 = arith.constant 0 : i32
    return %c0_i32, %c0_i32_0 : i32, i32
  }
  func.func @transform_2(%arg0: i32) -> (i32, i32) {
    %c0_i32 = arith.constant 0 : i32
    %c0_i32_0 = arith.constant 0 : i32
    %c0_i32_1 = arith.constant 0 : i32
    return %c0_i32, %c0_i32_0 : i32, i32
  }
  func.func @transform_3(%arg0: i32) -> (i32, i32) {
    %c0_i32 = arith.constant 0 : i32
    %c0_i32_0 = arith.constant 0 : i32
    %c0_i32_1 = arith.constant 0 : i32
    return %c0_i32, %c0_i32_0 : i32, i32
  }
  func.func @transform_4(%arg0: i32) -> (i32, i32) {
    %c0_i32 = arith.constant 0 : i32
    %c0_i32_0 = arith.constant 0 : i32
    %c0_i32_1 = arith.constant 0 : i32
    return %c0_i32, %c0_i32_0 : i32, i32
  }
}

module attributes {stable_mosaic.version = 11 : i64} {
  func.func @kernel(%arg0: i32, %arg1: i32, %arg2: memref<1x128xi32, #tpu.memory_space<vmem>>, %arg3: memref<128x32xf32, #tpu.memory_space<vmem>>, %arg4: memref<8x32xf32, #tpu.memory_space<vmem>>, %arg5: memref<8x1xf32, #tpu.memory_space<vmem>>, %arg6: memref<8x32xf32, #tpu.memory_space<vmem>>, %arg7: memref<8x1xf32, #tpu.memory_space<vmem>>) attributes {dimension_semantics = [#tpu.dimension_semantics<parallel>, #tpu.dimension_semantics<arbitrary>], iteration_bounds = array<i64: 2, 2>, scalar_prefetch = 0 : i64, scratch_operands = 2 : i64, tpu.core_type = #tpu.core_type<tc>, window_params = [{transform_indices = @transform_0, window_bounds = array<i64: 1, 128>}, {transform_indices = @transform_1, window_bounds = array<i64: 128, 32>}, {transform_indices = @transform_2, window_bounds = array<i64: 8, 32>}, {transform_indices = @transform_3, window_bounds = array<i64: 8, 1>}]} {
    %c0_i32 = arith.constant 0 : i32
    %0 = arith.cmpi eq, %arg1, %c0_i32 : i32
    %1 = arith.extui %0 : i1 to i32
    %c0_i32_0 = arith.constant 0 : i32
    %2 = arith.cmpi ne, %1, %c0_i32_0 : i32
    scf.if %2 {
      %cst_16 = arith.constant 0.000000e+00 : f32
      %41 = vector.broadcast %cst_16 : f32 to vector<8x32xf32>
      %c0_17 = arith.constant 0 : index
      %c0_18 = arith.constant 0 : index
      %42 = vector.load %arg6[%c0_17, %c0_18] : memref<8x32xf32, #tpu.memory_space<vmem>>, vector<8x32xf32>
      tpu.vector_store %arg6[%c0_17, %c0_18], %41 {strides = array<i32>} : memref<8x32xf32, #tpu.memory_space<vmem>>, vector<8x32xf32>,
      %cst_19 = arith.constant 0.000000e+00 : f32
      %43 = vector.broadcast %cst_19 : f32 to vector<8x1xf32>
      %c0_20 = arith.constant 0 : index
      %c0_21 = arith.constant 0 : index
      %44 = vector.load %arg7[%c0_20, %c0_21] : memref<8x1xf32, #tpu.memory_space<vmem>>, vector<8x1xf32>
      tpu.vector_store %arg7[%c0_20, %c0_21], %43 {strides = array<i32>} : memref<8x1xf32, #tpu.memory_space<vmem>>, vector<8x1xf32>,
    } else {
    }
    %c2_i32 = arith.constant 2 : i32
    %3 = arith.muli %arg0, %c2_i32 : i32
    %4 = arith.addi %3, %arg1 : i32
    %c128_i32 = arith.constant 128 : i32
    %5 = arith.muli %4, %c128_i32 : i32
    %6 = tpu.iota {dimensions = array<i32: 1>} : vector<1x128xi32>
    %7 = vector.broadcast %5 : i32 to vector<1x128xi32>
    %8 = arith.addi %6, %7 : vector<1x128xi32>
    %c421_i32 = arith.constant 421 : i32
    %9 = vector.broadcast %c421_i32 : i32 to vector<1x128xi32>
    %10 = arith.cmpi slt, %8, %9 : vector<1x128xi32>
    %11 = tpu.iota {dimensions = array<i32: 0>} : vector<128x1xi32>
    %12 = vector.broadcast %5 : i32 to vector<128x1xi32>
    %13 = arith.addi %11, %12 : vector<128x1xi32>
    %c421_i32_1 = arith.constant 421 : i32
    %14 = vector.broadcast %c421_i32_1 : i32 to vector<128x1xi32>
    %15 = arith.cmpi slt, %13, %14 : vector<128x1xi32>
    %c0 = arith.constant 0 : index
    %c0_2 = arith.constant 0 : index
    %16 = vector.load %arg3[%c0, %c0_2] : memref<128x32xf32, #tpu.memory_space<vmem>>, vector<128x32xf32>
    %cst = arith.constant 0.000000e+00 : f32
    %17 = vector.shape_cast %15 : vector<128x1xi1> to vector<128x1xi1>
    %18 = vector.broadcast %17 : vector<128x1xi1> to vector<128x32xi1>
    %19 = vector.broadcast %cst : f32 to vector<128x32xf32>
    %20 = arith.select %18, %16, %19 : vector<128x32xi1>, vector<128x32xf32>
    %c0_3 = arith.constant 0 : index
    %c0_4 = arith.constant 0 : index
    %21 = vector.load %arg2[%c0_3, %c0_4] : memref<1x128xi32, #tpu.memory_space<vmem>>, vector<1x128xi32>
    %22 = tpu.iota {dimensions = array<i32: 0>} : vector<8x128xi32>
    %23 = vector.broadcast %21 : vector<1x128xi32> to vector<8x128xi32>
    %24 = arith.cmpi eq, %22, %23 : vector<8x128xi32>
    %25 = vector.broadcast %10 : vector<1x128xi1> to vector<8x128xi1>
    %26 = arith.andi %24, %25 : vector<8x128xi1>
    %27 = arith.extui %26 : vector<8x128xi1> to vector<8x128xi32>
    %28 = arith.sitofp %27 : vector<8x128xi32> to vector<8x128xf32>
    %c0_5 = arith.constant 0 : index
    %c0_6 = arith.constant 0 : index
    %29 = vector.load %arg6[%c0_5, %c0_6] : memref<8x32xf32, #tpu.memory_space<vmem>>, vector<8x32xf32>
    %cst_7 = arith.constant dense<0.000000e+00> : vector<8x32xf32>
    %30 = tpu.matmul %28, %20, %cst_7 {dimension_numbers = #tpu.dot_dimension_numbers<[1], [0], [0], [1], [0, 0, 1, 1], [], []>} : vector<8x128xf32>, vector<128x32xf32>, vector<8x32xf32> -> vector<8x32xf32>
    %31 = arith.addf %29, %30 : vector<8x32xf32>
    %c0_8 = arith.constant 0 : index
    %c0_9 = arith.constant 0 : index
    %32 = vector.load %arg6[%c0_8, %c0_9] : memref<8x32xf32, #tpu.memory_space<vmem>>, vector<8x32xf32>
    tpu.vector_store %arg6[%c0_8, %c0_9], %31 {strides = array<i32>} : memref<8x32xf32, #tpu.memory_space<vmem>>, vector<8x32xf32>,
    %c0_10 = arith.constant 0 : index
    %c0_11 = arith.constant 0 : index
    %33 = vector.load %arg7[%c0_10, %c0_11] : memref<8x1xf32, #tpu.memory_space<vmem>>, vector<8x1xf32>
    %cst_12 = arith.constant dense<0.000000e+00> : vector<8xf32>
    %34 = vector.multi_reduction <add>, %28, %cst_12 [1] : vector<8x128xf32> to vector<8xf32>
    %35 = vector.shape_cast %34 : vector<8xf32> to vector<8x1xf32>
    %36 = arith.addf %33, %35 : vector<8x1xf32>
    %c0_13 = arith.constant 0 : index
    %c0_14 = arith.constant 0 : index
    %37 = vector.load %arg7[%c0_13, %c0_14] : memref<8x1xf32, #tpu.memory_space<vmem>>, vector<8x1xf32>
    tpu.vector_store %arg7[%c0_13, %c0_14], %36 {strides = array<i32>} : memref<8x1xf32, #tpu.memory_space<vmem>>, vector<8x1xf32>,
    %c1_i32 = arith.constant 1 : i32
    %38 = arith.cmpi eq, %arg1, %c1_i32 : i32
    %39 = arith.extui %38 : i1 to i32
    %c0_i32_15 = arith.constant 0 : i32
    %40 = arith.cmpi ne, %39, %c0_i32_15 : i32
    scf.if %40 {
      %c0_16 = arith.constant 0 : index
      %c0_17 = arith.constant 0 : index
      %41 = vector.load %arg6[%c0_16, %c0_17] : memref<8x32xf32, #tpu.memory_space<vmem>>, vector<8x32xf32>
      %c0_18 = arith.constant 0 : index
      %c0_19 = arith.constant 0 : index
      %42 = vector.load %arg4[%c0_18, %c0_19] : memref<8x32xf32, #tpu.memory_space<vmem>>, vector<8x32xf32>
      tpu.vector_store %arg4[%c0_18, %c0_19], %41 {strides = array<i32>} : memref<8x32xf32, #tpu.memory_space<vmem>>, vector<8x32xf32>,
      %c0_20 = arith.constant 0 : index
      %c0_21 = arith.constant 0 : index
      %43 = vector.load %arg7[%c0_20, %c0_21] : memref<8x1xf32, #tpu.memory_space<vmem>>, vector<8x1xf32>
      %c0_22 = arith.constant 0 : index
      %c0_23 = arith.constant 0 : index
      %44 = vector.load %arg5[%c0_22, %c0_23] : memref<8x1xf32, #tpu.memory_space<vmem>>, vector<8x1xf32>
      tpu.vector_store %arg5[%c0_22, %c0_23], %43 {strides = array<i32>} : memref<8x1xf32, #tpu.memory_space<vmem>>, vector<8x1xf32>,
    } else {
    }
    return
  }
  func.func @transform_0(%arg0: i32, %arg1: i32) -> (i32, i32) {
    %c2_i32 = arith.constant 2 : i32
    %0 = arith.muli %arg0, %c2_i32 : i32
    %1 = arith.addi %0, %arg1 : i32
    %c3_i32 = arith.constant 3 : i32
    %2 = arith.minsi %1, %c3_i32 : i32
    %c0_i32 = arith.constant 0 : i32
    %c0_i32_0 = arith.constant 0 : i32
    return %c0_i32, %2 : i32, i32
  }
  func.func @transform_1(%arg0: i32, %arg1: i32) -> (i32, i32) {
    %c2_i32 = arith.constant 2 : i32
    %0 = arith.muli %arg0, %c2_i32 : i32
    %1 = arith.addi %0, %arg1 : i32
    %c3_i32 = arith.constant 3 : i32
    %2 = arith.minsi %1, %c3_i32 : i32
    %c0_i32 = arith.constant 0 : i32
    %c0_i32_0 = arith.constant 0 : i32
    return %2, %c0_i32 : i32, i32
  }
  func.func @transform_2(%arg0: i32, %arg1: i32) -> (i32, i32) {
    %c0_i32 = arith.constant 0 : i32
    %c0_i32_0 = arith.constant 0 : i32
    return %arg0, %c0_i32 : i32, i32
  }
  func.func @transform_3(%arg0: i32, %arg1: i32) -> (i32, i32) {
    %c0_i32 = arith.constant 0 : i32
    %c0_i32_0 = arith.constant 0 : i32
    return %arg0, %c0_i32 : i32, i32
  }
}

</mosaic_0001>

<llo_original>
// kernel: cpcc_loss.2
$region0: #{cpcc_loss.2}
  #allocation0 [shape = 'u32[]', space=smem, size = 0x4, offset = 0x4, fixed_abs, tag = 'smem constant byte address 0x4 - core index']
  #allocation1 [shape = 'u32[72,128]{1,0:T(1,128)}', space=vmem, size = 0x9000, scoped, tag = 'internal scratch']
  #allocation2 [shape = 'f32[8,32]{1,0:T(8,128)}', space=vmem, size = 0x1000, scoped, tag = 'scratch operand']
  #allocation3 [shape = 'f32[8,1]{1,0:T(8,128)}', space=vmem, size = 0x1000, scoped, tag = 'scratch operand']
  %s0 = inlined_call_operand.vmem [shape: s32[1,421], index: 0, kind: input, shape index: {}]
  %s1 = inlined_call_operand.vmem [shape: f32[421,32], index: 1, kind: input, shape index: {}]
  %s2 = inlined_call_operand.vmem [shape: f32[16,32], index: 2, kind: output, shape index: {0}]
  %s3 = inlined_call_operand.vmem [shape: f32[16,1], index: 3, kind: output, shape index: {1}]
  %4 = xla_tuple %s2, %s3
  %s5 = sld [smem:[#allocation0]]
  $region57: #{cpcc_loss.2} parent=0
    _
  %s7 = ssub.s32 1, %s5
  %s8 = scalar_select 0, %s7, %s5
  loop: start=0, step=1, limit=6
  $region2: #{cpcc_loss.2} parent=0 // loop_pre_header
    _
  $region3: #{cpcc_loss.2} parent=0 // loop_header
    %s10 = sphi 0, %s14
    %p11 = scmp.ge.s32.totalorder %s10, 6
    %s17 = sphi 0, %s29
    %s18 = sphi 0, %s25
    %s19 = sphi 0, %s17
    %s20 = sphi 0, %s18
    %s21 = sphi 0, %s19
    %s22 = sphi 0, %s20
    %s40 = sphi 0, %s42
    %s43 = sphi 0, %s40
    %s44 = sphi 0, %s43
    %s60 = sphi 0, %s44
    %s74 = sphi 0, %s76
    %s77 = sphi 0, %s74
    %s78 = sphi 0, %s77
    %s94 = sphi 0, %s78
    %s100 = sphi 0, %s102
    %s103 = sphi 0, %s100
    %s104 = sphi 0, %s103
    %s120 = sphi 0, %s104
    %s126 = sphi 0, %s128
    %s129 = sphi 0, %s126
    %s130 = sphi 0, %s129
    %s146 = sphi 0, %s130
  $region4: #{cpcc_loss.2} parent=0 // loop_header_branch
    %13 = sbr.rel (%p11) target = $region8
  $region5: #{cpcc_loss.2} parent=0 // loop_body
    %s15 = ssub.s32 %s10, 1
    %s16 = ssub.s32 %s10, 2
    %s23 = sadd.s32 1, %s18
    %p24 = scmp.ge.s32.totalorder %s23, 2
    %s25 = scalar_select %p24, 0, %s23
    %s26 = sadd.s32 1, %s17
    %s27 = scalar_select %p24, %s26, %s17
    %p28 = scmp.ge.s32.totalorder %s27, 2
    %s29 = scalar_select %p28, 0, %s27
    %s30 = smul.u32 %s17, 2
    %s31 = sadd.s32 %s30, %s18
    %p32 = scmp.lt.s32.totalorder %s31, 3
    %s33 = scalar_select %p32, %s31, 3
    %s34 = smul.u32 %s29, 2
    %s35 = sadd.s32 %s34, %s25
    %p36 = scmp.lt.s32.totalorder %s35, 3
    %s37 = scalar_select %p36, %s35, 3
    %s38 = ssub.s32 %s33, %s37
    %p39 = scmp.eq.s32.totalorder %s38, 0
    %s41 = sadd.s32 %s40, 1
    %s42 = scalar_select %p39, %s40, %s41
    %p45 = pneg %p39
    %p46 = scmp.eq.s32.totalorder %s10, 3
    %p47 = por %p45, %p46
    %p48 = scmp.ne.s32.totalorder %s40, %s43
    %p49 = scmp.eq.s32.totalorder %s10, 0
    %p50 = por %p48, %p49
    %p51 = scmp.ne.s32.totalorder %s40, %s43
    %p52 = scmp.eq.s32.totalorder %s15, 3
    %p53 = por %p51, %p52
    %p54 = scmp.ne.s32.totalorder %s43, %s44
    %p55 = scmp.eq.s32.totalorder %s15, 0
    %p56 = por %p54, %p55
    %p57 = scmp.ne.s32.totalorder %s43, %s44
    %p58 = scmp.eq.s32.totalorder %s16, 3
    %p59 = por %p57, %p58
    %p61 = scmp.ne.s32.totalorder %s44, %s60
    %p62 = scmp.eq.s32.totalorder %s16, 0
    %p63 = por %p61, %p62
    %s64 = smul.u32 %s17, 2
    %s65 = sadd.s32 %s64, %s18
    %p66 = scmp.lt.s32.totalorder %s65, 3
    %s67 = scalar_select %p66, %s65, 3
    %s68 = smul.u32 %s29, 2
    %s69 = sadd.s32 %s68, %s25
    %p70 = scmp.lt.s32.totalorder %s69, 3
    %s71 = scalar_select %p70, %s69, 3
    %s72 = ssub.s32 %s67, %s71
    %p73 = scmp.eq.s32.totalorder %s72, 0
    %s75 = sadd.s32 %s74, 1
    %s76 = scalar_select %p73, %s74, %s75
    %p79 = pneg %p73
    %p80 = scmp.eq.s32.totalorder %s10, 3
    %p81 = por %p79, %p80
    %p82 = scmp.ne.s32.totalorder %s74, %s77
    %p83 = scmp.eq.s32.totalorder %s10, 0
    %p84 = por %p82, %p83
    %p85 = scmp.ne.s32.totalorder %s74, %s77
    %p86 = scmp.eq.s32.totalorder %s15, 3
    %p87 = por %p85, %p86
    %p88 = scmp.ne.s32.totalorder %s77, %s78
    %p89 = scmp.eq.s32.totalorder %s15, 0
    %p90 = por %p88, %p89
    %p91 = scmp.ne.s32.totalorder %s77, %s78
    %p92 = scmp.eq.s32.totalorder %s16, 3
    %p93 = por %p91, %p92
    %p95 = scmp.ne.s32.totalorder %s78, %s94
    %p96 = scmp.eq.s32.totalorder %s16, 0
    %p97 = por %p95, %p96
    %s98 = ssub.s32 %s17, %s29
    %p99 = scmp.eq.s32.totalorder %s98, 0
    %s101 = sadd.s32 %s100, 1
    %s102 = scalar_select %p99, %s100, %s101
    %p105 = pneg %p99
    %p106 = scmp.eq.s32.totalorder %s10, 3
    %p107 = por %p105, %p106
    %p108 = scmp.ne.s32.totalorder %s100, %s103
    %p109 = scmp.eq.s32.totalorder %s10, 0
    %p110 = por %p108, %p109
    %p111 = scmp.ne.s32.totalorder %s100, %s103
    %p112 = scmp.eq.s32.totalorder %s15, 3
    %p113 = por %p111, %p112
    %p114 = scmp.ne.s32.totalorder %s103, %s104
    %p115 = scmp.eq.s32.totalorder %s15, 0
    %p116 = por %p114, %p115
    %p117 = scmp.ne.s32.totalorder %s103, %s104
    %p118 = scmp.eq.s32.totalorder %s16, 3
    %p119 = por %p117, %p118
    %p121 = scmp.ne.s32.totalorder %s104, %s120
    %p122 = scmp.eq.s32.totalorder %s16, 0
    %p123 = por %p121, %p122
    %s124 = ssub.s32 %s17, %s29
    %p125 = scmp.eq.s32.totalorder %s124, 0
    %s127 = sadd.s32 %s126, 1
    %s128 = scalar_select %p125, %s126, %s127
    %p131 = pneg %p125
    %p132 = scmp.eq.s32.totalorder %s10, 3
    %p133 = por %p131, %p132
    %p134 = scmp.ne.s32.totalorder %s126, %s129
    %p135 = scmp.eq.s32.totalorder %s10, 0
    %p136 = por %p134, %p135
    %p137 = scmp.ne.s32.totalorder %s126, %s129
    %p138 = scmp.eq.s32.totalorder %s15, 3
    %p139 = por %p137, %p138
    %p140 = scmp.ne.s32.totalorder %s129, %s130
    %p141 = scmp.eq.s32.totalorder %s15, 0
    %p142 = por %p140, %p141
    %p143 = scmp.ne.s32.totalorder %s129, %s130
    %p144 = scmp.eq.s32.totalorder %s16, 3
    %p145 = por %p143, %p144
    %p147 = scmp.ne.s32.totalorder %s130, %s146
    %p148 = scmp.eq.s32.totalorder %s16, 0
    %p149 = por %p147, %p148
    %p150 = scmp.le.s32.totalorder 1, %s10
    %p151 = scmp.lt.s32.totalorder %s10, 5
    %p152 = pnand %p150, %p151
    %p153 = pneg %p152
    // Predicated region
    $region9: #{cpcc_loss.2} parent=5 // pred_check
      _
    $region10: #{cpcc_loss.2} parent=5 // pred_check_branch
      %155 = sbr.rel (%p152) target = $region12
    $region11: #{cpcc_loss.2} parent=5 // pred_region
      %s156 = ssub.s32 %s10, 1
    $region12: #{cpcc_loss.2} parent=5 // pred_fallthru
      _
    %p157 = scmp.lt.s32.totalorder %s10, 4
    // Predicated region
    $region13: #{cpcc_loss.2} parent=5 // pred_check
      %p158 = pneg %p157
    $region14: #{cpcc_loss.2} parent=5 // pred_check_branch
      %160 = sbr.rel (%p158) target = $region16
    $region15: #{cpcc_loss.2} parent=5 // pred_region
      // Predicated region
      $region17: #{cpcc_loss.2} parent=15 // pred_check
        %p161 = pneg %p50
      $region18: #{cpcc_loss.2} parent=15 // pred_check_branch
        %163 = sbr.rel (%p161) target = $region20
      $region19: #{cpcc_loss.2} parent=15 // pred_region
        %s164 = smul.u32 %s17, 2
        %s165 = sadd.s32 %s164, %s18
        %p166 = scmp.lt.s32.totalorder %s165, 3
        %s167 = scalar_select %p166, %s165, 3
        %p168 = scmp.lt.s32.totalorder %s167, 3
        %s169 = scalar_select %p168, %s167, 3
        %s170 = scalar_lea.vmem %s0, %s169
        %s171 = smul.u32 %s17, 2
        %s172 = sadd.s32 %s171, %s18
        %p173 = scmp.lt.s32.totalorder %s172, 3
        %s174 = scalar_select %p173, %s172, 3
      $region20: #{cpcc_loss.2} parent=15 // pred_fallthru
        _
      // Predicated region
      $region21: #{cpcc_loss.2} parent=15 // pred_check
        %p175 = pneg %p84
      $region22: #{cpcc_loss.2} parent=15 // pred_check_branch
        %177 = sbr.rel (%p175) target = $region24
      $region23: #{cpcc_loss.2} parent=15 // pred_region
        %s178 = smul.u32 %s17, 2
        %s179 = sadd.s32 %s178, %s18
        %p180 = scmp.lt.s32.totalorder %s179, 3
        %s181 = scalar_select %p180, %s179, 3
        %s182 = smul.u32 16, %s181
        %s183 = ssub.s32 53, %s182
        %p184 = scmp.lt.s32.totalorder %s183, 16
        %s185 = scalar_select %p184, %s183, 16
        %s186 = smul.u32 8, %s185
        %p187 = scmp.lt.s32.totalorder %s182, 52
        %s188 = scalar_select %p187, %s182, 52
        %s189 = smul.addr %s188, 8
        %s190 = scalar_lea.vmem %s1, %s189
        %s191 = smul.u32 %s17, 2
        %s192 = sadd.s32 %s191, %s18
        %p193 = scmp.lt.s32.totalorder %s192, 3
        %s194 = scalar_select %p193, %s192, 3
        %s195 = smul.u32 16, %s194
        %s196 = ssub.s32 53, %s195
        %p197 = scmp.lt.s32.totalorder %s196, 16
        %s198 = scalar_select %p197, %s196, 16
        %s199 = smul.u32 8, %s198
      $region24: #{cpcc_loss.2} parent=15 // pred_fallthru
        _
    $region16: #{cpcc_loss.2} parent=5 // pred_fallthru
      _
    %p200 = scmp.le.s32.totalorder 1, %s10
    %p201 = scmp.lt.s32.totalorder %s10, 5
    %p202 = pnand %p200, %p201
    %p203 = pneg %p202
    // Predicated region
    $region25: #{cpcc_loss.2} parent=5 // pred_check
      _
    $region26: #{cpcc_loss.2} parent=5 // pred_check_branch
      %205 = sbr.rel (%p202) target = $region28
    $region27: #{cpcc_loss.2} parent=5 // pred_region
      %s206 = ssub.s32 %s10, 1
      %s207 = smul.u32 %s19, 2
      %s208 = sadd.s32 %s207, %s20
      %p209 = scmp.lt.s32.totalorder %s208, 3
      %s210 = scalar_select %p209, %s208, 3
      %p211 = scmp.lt.s32.totalorder %s210, 3
      %s212 = scalar_select %p211, %s210, 3
      %s213 = scalar_lea.vmem %s0, %s212
      %p214 = pneg %p56
      %p215 = pneg %p53
      %s216 = smul.u32 %s19, 2
      %s217 = sadd.s32 %s216, %s20
      %p218 = scmp.lt.s32.totalorder %s217, 3
      %s219 = scalar_select %p218, %s217, 3
      %s220 = smul.u32 16, %s219
      %s221 = ssub.s32 53, %s220
      %p222 = scmp.lt.s32.totalorder %s221, 16
      %s223 = scalar_select %p222, %s221, 16
      %s224 = smul.u32 8, %s223
      %p225 = scmp.lt.s32.totalorder %s220, 52
      %s226 = scalar_select %p225, %s220, 52
      %s227 = smul.addr %s226, 8
      %s228 = scalar_lea.vmem %s1, %s227
      %p229 = pneg %p90
      %p230 = pneg %p87
      %p231 = pneg %p116
      %p232 = pneg %p113
      %p233 = scmp.lt.s32.totalorder %s19, 1
      %s234 = scalar_select %p233, %s19, 1
      %s235 = smul.addr %s234, 8
      %s236 = scalar_lea.vmem %s2, %s235
      %p237 = pneg %p142
      %p238 = pneg %p139
      %p239 = scmp.lt.s32.totalorder %s19, 1
      %s240 = scalar_select %p239, %s19, 1
      %s241 = smul.addr %s240, 8
      %s242 = scalar_lea.vmem %s3, %s241
      %s243 = smul.u32 %s19, 2
      %s244 = sadd.s32 %s243, %s20
      %p245 = scmp.lt.s32.totalorder %s244, 3
      %s246 = scalar_select %p245, %s244, 3
      %p247 = scmp.lt.s32.totalorder %s246, 3
      %s248 = scalar_select %p247, %s246, 3
      %s249 = scalar_lea.vmem %s0, %s248
      %s250 = smul.u32 %s19, 2
      %s251 = sadd.s32 %s250, %s20
      %p252 = scmp.lt.s32.totalorder %s251, 3
      %s253 = scalar_select %p252, %s251, 3
      %s254 = smul.u32 %s19, 2
      %s255 = sadd.s32 %s254, %s20
      %p256 = scmp.lt.s32.totalorder %s255, 3
      %s257 = scalar_select %p256, %s255, 3
      %s258 = smul.u32 16, %s257
      %s259 = ssub.s32 53, %s258
      %p260 = scmp.lt.s32.totalorder %s259, 16
      %s261 = scalar_select %p260, %s259, 16
      %s262 = smul.u32 8, %s261
      %p263 = scmp.lt.s32.totalorder %s258, 52
      %s264 = scalar_select %p263, %s258, 52
      %s265 = smul.addr %s264, 8
      %s266 = scalar_lea.vmem %s1, %s265
      %s267 = smul.u32 %s19, 2
      %s268 = sadd.s32 %s267, %s20
      %p269 = scmp.lt.s32.totalorder %s268, 3
      %s270 = scalar_select %p269, %s268, 3
      %s271 = smul.u32 16, %s270
      %s272 = ssub.s32 53, %s271
      %p273 = scmp.lt.s32.totalorder %s272, 16
      %s274 = scalar_select %p273, %s272, 16
      %s275 = smul.u32 8, %s274
      %p276 = scmp.lt.s32.totalorder %s19, 1
      %s277 = scalar_select %p276, %s19, 1
      %s278 = smul.addr %s277, 8
      %s279 = scalar_lea.vmem %s2, %s278
      %p280 = scmp.lt.s32.totalorder %s19, 1
      %s281 = scalar_select %p280, %s19, 1
      %s282 = smul.addr %s281, 8
      %s283 = scalar_lea.vmem %s3, %s282
      %p284 = scmp.eq.s32.totalorder %s20, 0
      // Predicated region
      $region29: #{cpcc_loss.2} parent=27 // pred_check
        %p285 = pneg %p284
      $region30: #{cpcc_loss.2} parent=27 // pred_check_branch
        %287 = sbr.rel (%p285) target = $region32
      $region31: #{cpcc_loss.2} parent=27 // pred_region
        %vm288 = vcmask 261120
        %289 = vst.msk [vmem:[#allocation2] sm:$0xff] %vm288, 0.0
        %vm290 = vcmask 7168
        %291 = vst.msk [vmem:[#allocation3] sm:$0xff] %vm290, 0.0
      $region32: #{cpcc_loss.2} parent=27 // pred_fallthru
        _
      %s292 = smul.u32 %s19, 2
      %s293 = sadd.s32 %s292, %s20
      %s294 = smul.u32 %s293, 128
      %v295 = vlaneseq
      %v296 = vand.u32 %v295, 127
      %v297 = vstv %s294
      %v298 = vadd.s32 %v296, %v297
      %vm299 = vcmp.lt.s32.totalorder %v298, 421
      %v300 = vlaneseq
      %v301 = vshrl.u32 %v300, 7
      %v302 = vadd.s32 %v301, 8
      %v303 = vadd.s32 %v301, 16
      %v304 = vadd.s32 %v301, 24
      %v305 = vadd.s32 %v301, 32
      %v306 = vadd.s32 %v301, 40
      %v307 = vadd.s32 %v301, 48
      %v308 = vadd.s32 %v301, 56
      %v309 = vadd.s32 %v301, 64
      %v310 = vadd.s32 %v301, 72
      %v311 = vadd.s32 %v301, 80
      %v312 = vadd.s32 %v301, 88
      %v313 = vadd.s32 %v301, 96
      %v314 = vadd.s32 %v301, 104
      %v315 = vadd.s32 %v301, 112
      %v316 = vadd.s32 %v301, 120
      %v317 = vadd.s32 %v301, %v297
      %v318 = vadd.s32 %v302, %v297
      %v319 = vadd.s32 %v303, %v297
      %v320 = vadd.s32 %v304, %v297
      %v321 = vadd.s32 %v305, %v297
      %v322 = vadd.s32 %v306, %v297
      %v323 = vadd.s32 %v307, %v297
      %v324 = vadd.s32 %v308, %v297
      %v325 = vadd.s32 %v309, %v297
      %v326 = vadd.s32 %v310, %v297
      %v327 = vadd.s32 %v311, %v297
      %v328 = vadd.s32 %v312, %v297
      %v329 = vadd.s32 %v313, %v297
      %v330 = vadd.s32 %v314, %v297
      %v331 = vadd.s32 %v315, %v297
      %v332 = vadd.s32 %v316, %v297
      %vm333 = vcmp.lt.s32.totalorder %v317, 421
      %vm334 = vcmp.lt.s32.totalorder %v318, 421
      %vm335 = vcmp.lt.s32.totalorder %v319, 421
      %vm336 = vcmp.lt.s32.totalorder %v320, 421
      %vm337 = vcmp.lt.s32.totalorder %v321, 421
      %vm338 = vcmp.lt.s32.totalorder %v322, 421
      %vm339 = vcmp.lt.s32.totalorder %v323, 421
      %vm340 = vcmp.lt.s32.totalorder %v324, 421
      %vm341 = vcmp.lt.s32.totalorder %v325, 421
      %vm342 = vcmp.lt.s32.totalorder %v326, 421
      %vm343 = vcmp.lt.s32.totalorder %v327, 421
      %vm344 = vcmp.lt.s32.totalorder %v328, 421
      %vm345 = vcmp.lt.s32.totalorder %v329, 421
      %vm346 = vcmp.lt.s32.totalorder %v330, 421
      %vm347 = vcmp.lt.s32.totalorder %v331, 421
      %vm348 = vcmp.lt.s32.totalorder %v332, 421
      %v349 = vld [vmem:[%s266] sm:$0xff]
      %v350 = vld [vmem:[%s266 + $0x8] sm:$0xff]
      %v351 = vld [vmem:[%s266 + $0x10] sm:$0xff]
      %v352 = vld [vmem:[%s266 + $0x18] sm:$0xff]
      %v353 = vld [vmem:[%s266 + $0x20] sm:$0xff]
      %v354 = vld [vmem:[%s266 + $0x28] sm:$0xff]
      %v355 = vld [vmem:[%s266 + $0x30] sm:$0xff]
      %v356 = vld [vmem:[%s266 + $0x38] sm:$0xff]
      %v357 = vld [vmem:[%s266 + $0x40] sm:$0xff]
      %v358 = vld [vmem:[%s266 + $0x48] sm:$0xff]
      %v359 = vld [vmem:[%s266 + $0x50] sm:$0xff]
      %v360 = vld [vmem:[%s266 + $0x58] sm:$0xff]
      %v361 = vld [vmem:[%s266 + $0x60] sm:$0xff]
      %v362 = vld [vmem:[%s266 + $0x68] sm:$0xff]
      %v363 = vld [vmem:[%s266 + $0x70] sm:$0xff]
      %v364 = vld [vmem:[%s266 + $0x78] sm:$0xff]
      %v365 = vsel %vm333, 1, 0
      %v366 = vsel %vm334, 1, 0
      %v367 = vsel %vm335, 1, 0
      %v368 = vsel %vm336, 1, 0
      %v369 = vsel %vm337, 1, 0
      %v370 = vsel %vm338, 1, 0
      %v371 = vsel %vm339, 1, 0
      %v372 = vsel %vm340, 1, 0
      %v373 = vsel %vm341, 1, 0
      %v374 = vsel %vm342, 1, 0
      %v375 = vsel %vm343, 1, 0
      %v376 = vsel %vm344, 1, 0
      %v377 = vsel %vm345, 1, 0
      %v378 = vsel %vm346, 1, 0
      %v379 = vsel %vm347, 1, 0
      %v380 = vsel %vm348, 1, 0
      %vm381 = vcmp.eq.s32.totalorder %v365, 1
      %vm382 = vcmp.eq.s32.totalorder %v366, 1
      %vm383 = vcmp.eq.s32.totalorder %v367, 1
      %vm384 = vcmp.eq.s32.totalorder %v368, 1
      %vm385 = vcmp.eq.s32.totalorder %v369, 1
      %vm386 = vcmp.eq.s32.totalorder %v370, 1
      %vm387 = vcmp.eq.s32.totalorder %v371, 1
      %vm388 = vcmp.eq.s32.totalorder %v372, 1
      %vm389 = vcmp.eq.s32.totalorder %v373, 1
      %vm390 = vcmp.eq.s32.totalorder %v374, 1
      %vm391 = vcmp.eq.s32.totalorder %v375, 1
      %vm392 = vcmp.eq.s32.totalorder %v376, 1
      %vm393 = vcmp.eq.s32.totalorder %v377, 1
      %vm394 = vcmp.eq.s32.totalorder %v378, 1
      %vm395 = vcmp.eq.s32.totalorder %v379, 1
      %vm396 = vcmp.eq.s32.totalorder %v380, 1
      %v397 = vsel %vm381, %v349, 0.0
      %v398 = vsel %vm382, %v350, 0.0
      %v399 = vsel %vm383, %v351, 0.0
      %v400 = vsel %vm384, %v352, 0.0
      %v401 = vsel %vm385, %v353, 0.0
      %v402 = vsel %vm386, %v354, 0.0
      %v403 = vsel %vm387, %v355, 0.0
      %v404 = vsel %vm388, %v356, 0.0
      %v405 = vsel %vm389, %v357, 0.0
      %v406 = vsel %vm390, %v358, 0.0
      %v407 = vsel %vm391, %v359, 0.0
      %v408 = vsel %vm392, %v360, 0.0
      %v409 = vsel %vm393, %v361, 0.0
      %v410 = vsel %vm394, %v362, 0.0
      %v411 = vsel %vm395, %v363, 0.0
      %v412 = vsel %vm396, %v364, 0.0
      %v413 = vld [vmem:[%s249] sm:$0x1]
      %v414 = vperm.slane %v413, 0
      %vm415 = vcmp.eq.s32.totalorder %v301, %v414
      %v416 = vsel %vm299, 1, 0
      %vm417 = vcmp.eq.s32.totalorder %v416, 1
      %vm418 = vmand %vm415, %vm417
      %v419 = vsel %vm418, 1, 0
      %v420 = vcvt.s32.f32 %v419
      %v421 = vld [vmem:[#allocation2] sm:$0xff]
      %422 = vmatpush.msra.mxu0 %v412
      %423 = vmatpush.msra.mxu0 %v411
      %424 = vmatpush.msra.mxu0 %v410
      %425 = vmatpush.msra.mxu0 %v409
      %426 = vmatpush.msra.mxu0 %v408
      %427 = vmatpush.msra.mxu0 %v407
      %428 = vmatpush.msra.mxu0 %v406
      %429 = vmatpush.msra.mxu0 %v405
      %430 = vmatpush.msra.mxu0 %v404
      %431 = vmatpush.msra.mxu0 %v403
      %432 = vmatpush.msra.mxu0 %v402
      %433 = vmatpush.msra.mxu0 %v401
      %434 = vmatpush.msra.mxu0 %v400
      %435 = vmatpush.msra.mxu0 %v399
      %436 = vmatpush.msra.mxu0 %v398
      %437 = vmatpush.msra.mxu0 %v397
      %438 = vmatmul.f32.gmra.mxu0 %v420
      %v439 = vpop.f32.mrf.mxu0
      %v440 = vadd.f32 0.0, %v439
      %441 = vdwg.mxu0
      %v442 = vadd.f32 %v421, %v440
      %vm443 = vcmask 261120
      %444 = vst.msk [vmem:[#allocation2] sm:$0xff] %vm443, %v442
      %v445 = vld [vmem:[#allocation3] sm:$0xff]
      %446 = vadd.xlane.f32.xlu0 %v420
      %v447 = vpop.xlane.xlu0 %446
      %v448 = vadd.f32 %v445, %v447
      %vm449 = vcmask 7168
      %450 = vst.msk [vmem:[#allocation3] sm:$0xff] %vm449, %v448
      %p451 = scmp.eq.s32.totalorder %s20, 1
      // Predicated region
      $region33: #{cpcc_loss.2} parent=27 // pred_check
        %p452 = pneg %p451
      $region34: #{cpcc_loss.2} parent=27 // pred_check_branch
        %454 = sbr.rel (%p452) target = $region36
      $region35: #{cpcc_loss.2} parent=27 // pred_region
        %v455 = vld [vmem:[#allocation2] sm:$0xff]
        %456 = vst.msk [vmem:[%s279] sm:$0xff] %vm443, %v455
        %v457 = vld [vmem:[#allocation3] sm:$0xff]
        %458 = vst.msk [vmem:[%s283] sm:$0xff] %vm449, %v457
      $region36: #{cpcc_loss.2} parent=27 // pred_fallthru
        _
      %p459 = scmp.lt.s32.totalorder %s19, 1
      %s460 = scalar_select %p459, %s19, 1
      %s461 = smul.addr %s460, 8
      %s462 = scalar_lea.vmem %s2, %s461
      %p463 = scmp.lt.s32.totalorder %s19, 1
      %s464 = scalar_select %p463, %s19, 1
      %s465 = smul.addr %s464, 8
      %s466 = scalar_lea.vmem %s3, %s465
      // Predicated region
      $region37: #{cpcc_loss.2} parent=27 // pred_check
        %p467 = pneg %p113
      $region38: #{cpcc_loss.2} parent=27 // pred_check_branch
        %469 = sbr.rel (%p467) target = $region40
      $region39: #{cpcc_loss.2} parent=27 // pred_region
        _
      $region40: #{cpcc_loss.2} parent=27 // pred_fallthru
        _
      // Predicated region
      $region41: #{cpcc_loss.2} parent=27 // pred_check
        %p470 = pneg %p139
      $region42: #{cpcc_loss.2} parent=27 // pred_check_branch
        %472 = sbr.rel (%p470) target = $region44
      $region43: #{cpcc_loss.2} parent=27 // pred_region
        _
      $region44: #{cpcc_loss.2} parent=27 // pred_fallthru
        _
    $region28: #{cpcc_loss.2} parent=5 // pred_fallthru
      _
    %p473 = scmp.le.s32.totalorder 2, %s10
    // Predicated region
    $region45: #{cpcc_loss.2} parent=5 // pred_check
      %p474 = pneg %p473
    $region46: #{cpcc_loss.2} parent=5 // pred_check_branch
      %476 = sbr.rel (%p474) target = $region48
    $region47: #{cpcc_loss.2} parent=5 // pred_region
      %s477 = ssub.s32 %s10, 2
      // Predicated region
      $region49: #{cpcc_loss.2} parent=47 // pred_check
        %p478 = pneg %p119
      $region50: #{cpcc_loss.2} parent=47 // pred_check_branch
        %480 = sbr.rel (%p478) target = $region52
      $region51: #{cpcc_loss.2} parent=47 // pred_region
        %p481 = scmp.lt.s32.totalorder %s21, 1
        %s482 = scalar_select %p481, %s21, 1
        %s483 = smul.addr %s482, 8
        %s484 = scalar_lea.vmem %s2, %s483
      $region52: #{cpcc_loss.2} parent=47 // pred_fallthru
        _
      // Predicated region
      $region53: #{cpcc_loss.2} parent=47 // pred_check
        %p485 = pneg %p145
      $region54: #{cpcc_loss.2} parent=47 // pred_check_branch
        %487 = sbr.rel (%p485) target = $region56
      $region55: #{cpcc_loss.2} parent=47 // pred_region
        %p488 = scmp.lt.s32.totalorder %s21, 1
        %s489 = scalar_select %p488, %s21, 1
        %s490 = smul.addr %s489, 8
        %s491 = scalar_lea.vmem %s3, %s490
      $region56: #{cpcc_loss.2} parent=47 // pred_fallthru
        _
    $region48: #{cpcc_loss.2} parent=5 // pred_fallthru
      _
  $region6: #{cpcc_loss.2} parent=0 // loop_footer
    %s14 = sadd.s32 1, %s10
  $region7: #{cpcc_loss.2} parent=0 // loop_footer_branch
    %9 = sbr.rel target = $region3
  $region8: #{cpcc_loss.2} parent=0 // loop_exit
    _

// kernel: cpcc_loss.3
$region0: #{cpcc_loss.3}
  #allocation0 [shape = 'u32[]', space=smem, size = 0x4, offset = 0x4, fixed_abs, tag = 'smem constant byte address 0x4 - core index']
  #allocation1 [shape = 'u32[72,128]{1,0:T(1,128)}', space=vmem, size = 0x9000, scoped, tag = 'internal scratch']
  %s0 = inlined_call_operand.vmem [shape: f32[16,32], index: 0, kind: input, shape index: {}]
  %s1 = inlined_call_operand.vmem [shape: f32[16,1], index: 1, kind: input, shape index: {}]
  %s2 = inlined_call_operand.vmem [shape: s32[8,1], index: 2, kind: input, shape index: {}]
  %s3 = inlined_call_operand.vmem [shape: s32[1,8], index: 3, kind: input, shape index: {}]
  %s4 = inlined_call_operand.hbm [shape: f32[1,1], index: 4, kind: output, shape index: {}]
  %s5 = sld [smem:[#allocation0]]
  $region26: #{cpcc_loss.3} parent=0
    _
  %s7 = ssub.s32 1, %s5
  %s8 = scalar_select 0, %s7, %s5
  $region1: #{cpcc_loss.3} parent=0
    #allocation2 [shape = 'u8[512]{0}', space=vmem, size = 0x400, scoped, tag = 'output window, operand 0, single buffered']
    #allocation3 [shape = 's32[1]{0}', space=sflag, size = 0x4, scoped, tag = 'scoped memory for cpcc_loss.3']
    %9 = vsyncpa [#allocation3], 0
    // Predicated region
    $region2: #{cpcc_loss.3} parent=1 // pred_check
      _
    $region3: #{cpcc_loss.3} parent=1 // pred_check_branch
      %11 = sbr.rel (0) target = $region5
    $region4: #{cpcc_loss.3} parent=1 // pred_region
      _
    $region5: #{cpcc_loss.3} parent=1 // pred_fallthru
      _
    // Predicated region
    $region6: #{cpcc_loss.3} parent=1 // pred_check
      _
    $region7: #{cpcc_loss.3} parent=1 // pred_check_branch
      %13 = sbr.rel (0) target = $region9
    $region8: #{cpcc_loss.3} parent=1 // pred_region
      _
    $region9: #{cpcc_loss.3} parent=1 // pred_fallthru
      _
    // Predicated region
    $region10: #{cpcc_loss.3} parent=1 // pred_check
      _
    $region11: #{cpcc_loss.3} parent=1 // pred_check_branch
      %15 = sbr.rel (0) target = $region13
    $region12: #{cpcc_loss.3} parent=1 // pred_region
      _
    $region13: #{cpcc_loss.3} parent=1 // pred_fallthru
      _
    // Predicated region
    $region14: #{cpcc_loss.3} parent=1 // pred_check
      _
    $region15: #{cpcc_loss.3} parent=1 // pred_check_branch
      %17 = sbr.rel (0) target = $region17
    $region16: #{cpcc_loss.3} parent=1 // pred_region
      _
    $region17: #{cpcc_loss.3} parent=1 // pred_fallthru
      _
    %v18 = vld [vmem:[%s0] sm:$0xff]
    %v19 = vld [vmem:[%s1] sm:$0xff]
    %v20 = vld [vmem:[%s0 + $0x8] sm:$0xff]
    %v21 = vadd.f32 %v18, %v20
    %v22 = vld [vmem:[%s1 + $0x8] sm:$0xff]
    %v23 = vadd.f32 %v19, %v22
    %v24 = vmax.f32 %v23, 1.0
    %v25 = vrcp.pop %v24
    %v26 = vmul.f32 %v24, %v25
    %v27 = vsub.f32 1.0, %v26
    %v28 = vmul.f32 %v25, %v27
    %v29 = vadd.f32 %v25, %v28
    %vm30 = vweird.f32 %v24
    %vm31 = vweird.f32 %v25
    %vm32 = vmor %vm30, %vm31
    %v33 = vsel %vm32, %v25, %v29
    %v34 = vand.u32 2147483647, %v24
    %vm35 = vcmp.eq.f32.partialorder %v34, 8.507059e+37
    %v36 = vand.u32 %v24, 2147483648
    %v37 = vor.u32 1.1754944e-38, %v36
    %v38 = vsel %vm35, %v37, %v33
    %v39 = vmul.f32 1.0, %v38
    %41 = vset.pattern.permute.xlu0 0
    %42 = vperm.xlu0 %41, %v39
    %v43 = vpop.permute.xlu0 %42
    %v45 = vmul.f32 %v21, %v43
    %v47 = vrot.slane %v45, 1
    %v48 = vrot.slane %v45, 2
    %v49 = vrot.slane %v45, 3
    %v50 = vrot.slane %v45, 4
    %v51 = vrot.slane %v45, 5
    %v52 = vrot.slane %v45, 6
    %v53 = vrot.slane %v45, 7
    %v54 = vperm.slane %v45, 0
    %v55 = vperm.slane %v47, 0
    %v56 = vperm.slane %v48, 0
    %v57 = vperm.slane %v49, 0
    %v58 = vperm.slane %v50, 0
    %v59 = vperm.slane %v51, 0
    %v60 = vperm.slane %v52, 0
    %v61 = vperm.slane %v53, 0
    %v70 = vsub.f32 %v54, %v45
    %v71 = vsub.f32 %v55, %v45
    %v72 = vsub.f32 %v56, %v45
    %v73 = vsub.f32 %v57, %v45
    %v74 = vsub.f32 %v58, %v45
    %v75 = vsub.f32 %v59, %v45
    %v76 = vsub.f32 %v60, %v45
    %v77 = vsub.f32 %v61, %v45
    %v78 = vmul.f32 %v70, %v70
    %v79 = vmul.f32 %v71, %v71
    %v80 = vmul.f32 %v72, %v72
    %v81 = vmul.f32 %v73, %v73
    %v82 = vmul.f32 %v74, %v74
    %v83 = vmul.f32 %v75, %v75
    %v84 = vmul.f32 %v76, %v76
    %v85 = vmul.f32 %v77, %v77
    %vm86 = vcmask 261120
    %v87 = vsel %vm86, %v78, 0.0
    %88 = vadd.xlane.f32.xlu0 %v87
    %v89 = vpop.xlane.xlu0 %88
    %v90 = vsel %vm86, %v79, 0.0
    %91 = vadd.xlane.f32.xlu0 %v90
    %v92 = vpop.xlane.xlu0 %91
    %v93 = vsel %vm86, %v80, 0.0
    %94 = vadd.xlane.f32.xlu0 %v93
    %v95 = vpop.xlane.xlu0 %94
    %v96 = vsel %vm86, %v81, 0.0
    %97 = vadd.xlane.f32.xlu0 %v96
    %v98 = vpop.xlane.xlu0 %97
    %v99 = vsel %vm86, %v82, 0.0
    %100 = vadd.xlane.f32.xlu0 %v99
    %v101 = vpop.xlane.xlu0 %100
    %v102 = vsel %vm86, %v83, 0.0
    %103 = vadd.xlane.f32.xlu0 %v102
    %v104 = vpop.xlane.xlu0 %103
    %v105 = vsel %vm86, %v84, 0.0
    %106 = vadd.xlane.f32.xlu0 %v105
    %v107 = vpop.xlane.xlu0 %106
    %v108 = vsel %vm86, %v85, 0.0
    %109 = vadd.xlane.f32.xlu0 %v108
    %v110 = vpop.xlane.xlu0 %109
    %v111 = vrsqrt.pop %v89
    %v112 = vmul.f32 %v111, %v89
    %v113 = vmul.f32 %v112, %v111
    %v114 = vmul.f32 0.5, %v113
    %v115 = vsub.f32 1.5, %v114
    %v116 = vmul.f32 %v111, %v115
    %v117 = vmul.f32 %v89, %v116
    %vm118 = vcmp.eq.f32.partialorder %v89, inf
    %v119 = vsel %vm118, %v89, %v117
    %vm120 = vcmp.eq.f32.partialorder %v89, 0.0
    %v121 = vand.u32 %v89, 2147483648
    %v122 = vsel %vm120, %v121, %v119
    %v123 = vrsqrt.pop %v92
    %v124 = vmul.f32 %v123, %v92
    %v125 = vmul.f32 %v124, %v123
    %v126 = vmul.f32 0.5, %v125
    %v127 = vsub.f32 1.5, %v126
    %v128 = vmul.f32 %v123, %v127
    %v129 = vmul.f32 %v92, %v128
    %vm130 = vcmp.eq.f32.partialorder %v92, inf
    %v131 = vsel %vm130, %v92, %v129
    %vm132 = vcmp.eq.f32.partialorder %v92, 0.0
    %v133 = vand.u32 %v92, 2147483648
    %v134 = vsel %vm132, %v133, %v131
    %v135 = vrsqrt.pop %v95
    %v136 = vmul.f32 %v135, %v95
    %v137 = vmul.f32 %v136, %v135
    %v138 = vmul.f32 0.5, %v137
    %v139 = vsub.f32 1.5, %v138
    %v140 = vmul.f32 %v135, %v139
    %v141 = vmul.f32 %v95, %v140
    %vm142 = vcmp.eq.f32.partialorder %v95, inf
    %v143 = vsel %vm142, %v95, %v141
    %vm144 = vcmp.eq.f32.partialorder %v95, 0.0
    %v145 = vand.u32 %v95, 2147483648
    %v146 = vsel %vm144, %v145, %v143
    %v147 = vrsqrt.pop %v98
    %v148 = vmul.f32 %v147, %v98
    %v149 = vmul.f32 %v148, %v147
    %v150 = vmul.f32 0.5, %v149
    %v151 = vsub.f32 1.5, %v150
    %v152 = vmul.f32 %v147, %v151
    %v153 = vmul.f32 %v98, %v152
    %vm154 = vcmp.eq.f32.partialorder %v98, inf
    %v155 = vsel %vm154, %v98, %v153
    %vm156 = vcmp.eq.f32.partialorder %v98, 0.0
    %v157 = vand.u32 %v98, 2147483648
    %v158 = vsel %vm156, %v157, %v155
    %v159 = vrsqrt.pop %v101
    %v160 = vmul.f32 %v159, %v101
    %v161 = vmul.f32 %v160, %v159
    %v162 = vmul.f32 0.5, %v161
    %v163 = vsub.f32 1.5, %v162
    %v164 = vmul.f32 %v159, %v163
    %v165 = vmul.f32 %v101, %v164
    %vm166 = vcmp.eq.f32.partialorder %v101, inf
    %v167 = vsel %vm166, %v101, %v165
    %vm168 = vcmp.eq.f32.partialorder %v101, 0.0
    %v169 = vand.u32 %v101, 2147483648
    %v170 = vsel %vm168, %v169, %v167
    %v171 = vrsqrt.pop %v104
    %v172 = vmul.f32 %v171, %v104
    %v173 = vmul.f32 %v172, %v171
    %v174 = vmul.f32 0.5, %v173
    %v175 = vsub.f32 1.5, %v174
    %v176 = vmul.f32 %v171, %v175
    %v177 = vmul.f32 %v104, %v176
    %vm178 = vcmp.eq.f32.partialorder %v104, inf
    %v179 = vsel %vm178, %v104, %v177
    %vm180 = vcmp.eq.f32.partialorder %v104, 0.0
    %v181 = vand.u32 %v104, 2147483648
    %v182 = vsel %vm180, %v181, %v179
    %v183 = vrsqrt.pop %v107
    %v184 = vmul.f32 %v183, %v107
    %v185 = vmul.f32 %v184, %v183
    %v186 = vmul.f32 0.5, %v185
    %v187 = vsub.f32 1.5, %v186
    %v188 = vmul.f32 %v183, %v187
    %v189 = vmul.f32 %v107, %v188
    %vm190 = vcmp.eq.f32.partialorder %v107, inf
    %v191 = vsel %vm190, %v107, %v189
    %vm192 = vcmp.eq.f32.partialorder %v107, 0.0
    %v193 = vand.u32 %v107, 2147483648
    %v194 = vsel %vm192, %v193, %v191
    %v195 = vrsqrt.pop %v110
    %v196 = vmul.f32 %v195, %v110
    %v197 = vmul.f32 %v196, %v195
    %v198 = vmul.f32 0.5, %v197
    %v199 = vsub.f32 1.5, %v198
    %v200 = vmul.f32 %v195, %v199
    %v201 = vmul.f32 %v110, %v200
    %vm202 = vcmp.eq.f32.partialorder %v110, inf
    %v203 = vsel %vm202, %v110, %v201
    %vm204 = vcmp.eq.f32.partialorder %v110, 0.0
    %v205 = vand.u32 %v110, 2147483648
    %v206 = vsel %vm204, %v205, %v203
    %v207 = vld [vmem:[%s2] sm:$0xff]
    %v208 = vld [vmem:[%s3] sm:$0x1]
    %209 = vset.pattern.permute.xlu0 0
    %210 = vperm.xlu0 %209, %v207
    %v211 = vpop.permute.xlu0 %210
    %v212 = vperm.slane %v208, 0
    %vm213 = vcmp.eq.s32.totalorder %v211, %v212
    %v214 = vsel %vm213, 2.0, 4.0
    %v215 = vlaneseq
    %v216 = vshrl.u32 %v215, 7
    %v217 = vlaneseq
    %v218 = vand.u32 %v217, 127
    %vm219 = vcmp.eq.s32.totalorder %v216, %v218
    %v220 = vsel %vm219, 1, 0
    %v221 = vcvt.s32.f32 %v220
    %vm222 = vcmp.gt.f32.partialorder %v23, 0.5
    %v223 = vsel %vm222, 1, 0
    %v224 = vcvt.s32.f32 %v223
    %226 = vset.pattern.permute.xlu0 0
    %227 = vperm.xlu0 %226, %v224
    %v228 = vpop.permute.xlu0 %227
    %v230 = vmul.f32 %v228, %v221
    %vm231 = vcmask 64512
    %v232 = vsel %vm231, %v230, 0.0
    %v233 = vrot.slane %v232, 4
    %v234 = vadd.f32 %v232, %v233
    %v235 = vrot.slane %v234, 2
    %v236 = vadd.f32 %v234, %v235
    %v237 = vrot.slane %v236, 1
    %v238 = vadd.f32 %v236, %v237
    %vm239 = vcmp.gt.s32.totalorder %v218, %v216
    %v240 = vsel %vm239, 1, 0
    %v241 = vcvt.s32.f32 %v240
    %v242 = vmul.f32 %v241, %v228
    %v243 = vmul.f32 %v242, %v238
    %v244 = vsel %vm231, %v243, 0.0
    %245 = vadd.xlane.f32.xlu0 %v244
    %v246 = vpop.xlane.xlu0 %245
    %v247 = vrot.slane %v246, 4
    %v248 = vadd.f32 %v246, %v247
    %v249 = vrot.slane %v248, 2
    %v250 = vadd.f32 %v248, %v249
    %v251 = vrot.slane %v250, 1
    %v252 = vadd.f32 %v250, %v251
    %s253 = vtos %v252
    %v254 = vstv %s253
    %v255 = vmax.f32 %v254, 1.0
    %v256 = vrcp.pop %v255
    %v257 = vmul.f32 %v255, %v256
    %v258 = vsub.f32 1.0, %v257
    %v259 = vmul.f32 %v256, %v258
    %v260 = vadd.f32 %v256, %v259
    %vm261 = vweird.f32 %v255
    %vm262 = vweird.f32 %v256
    %vm263 = vmor %vm261, %vm262
    %v264 = vsel %vm263, %v256, %v260
    %v265 = vand.u32 2147483647, %v255
    %vm266 = vcmp.eq.f32.partialorder %v265, 8.507059e+37
    %v267 = vand.u32 %v255, 2147483648
    %v268 = vor.u32 1.1754944e-38, %v267
    %v269 = vsel %vm266, %v268, %v264
    %v270 = vmul.f32 1.0, %v269
    %v272 = vperm.slane %v243, 0
    %v273 = vlaneseq
    %v274 = vshrl.u32 %v273, 7
    %276 = vset.pattern.permute.xlu0 %v274
    %277 = vperm.xlu0 %276, %v272
    %v278 = vpop.permute.xlu0 %277
    %v279 = vperm.slane %v243, 1
    %v280 = vlaneseq
    %v281 = vshrl.u32 %v280, 7
    %283 = vset.pattern.permute.xlu0 %v281
    %284 = vperm.xlu0 %283, %v279
    %v285 = vpop.permute.xlu0 %284
    %v286 = vperm.slane %v243, 2
    %v287 = vlaneseq
    %v288 = vshrl.u32 %v287, 7
    %290 = vset.pattern.permute.xlu0 %v288
    %291 = vperm.xlu0 %290, %v286
    %v292 = vpop.permute.xlu0 %291
    %v293 = vperm.slane %v243, 3
    %v294 = vlaneseq
    %v295 = vshrl.u32 %v294, 7
    %297 = vset.pattern.permute.xlu0 %v295
    %298 = vperm.xlu0 %297, %v293
    %v299 = vpop.permute.xlu0 %298
    %v300 = vperm.slane %v243, 4
    %v301 = vlaneseq
    %v302 = vshrl.u32 %v301, 7
    %304 = vset.pattern.permute.xlu0 %v302
    %305 = vperm.xlu0 %304, %v300
    %v306 = vpop.permute.xlu0 %305
    %v307 = vperm.slane %v243, 5
    %v308 = vlaneseq
    %v309 = vshrl.u32 %v308, 7
    %311 = vset.pattern.permute.xlu0 %v309
    %312 = vperm.xlu0 %311, %v307
    %v313 = vpop.permute.xlu0 %312
    %v314 = vperm.slane %v243, 6
    %v315 = vlaneseq
    %v316 = vshrl.u32 %v315, 7
    %318 = vset.pattern.permute.xlu0 %v316
    %319 = vperm.xlu0 %318, %v314
    %v320 = vpop.permute.xlu0 %319
    %v321 = vperm.slane %v243, 7
    %v322 = vlaneseq
    %v323 = vshrl.u32 %v322, 7
    %325 = vset.pattern.permute.xlu0 %v323
    %326 = vperm.xlu0 %325, %v321
    %v327 = vpop.permute.xlu0 %326
    %v336 = vmul.f32 %v122, %v278
    %v337 = vmul.f32 %v134, %v285
    %v338 = vmul.f32 %v146, %v292
    %v339 = vmul.f32 %v158, %v299
    %v340 = vmul.f32 %v170, %v306
    %v341 = vmul.f32 %v182, %v313
    %v342 = vmul.f32 %v194, %v320
    %v343 = vmul.f32 %v206, %v327
    %352 = vset.pattern.permute.xlu0 0
    %353 = vperm.xlu0 %352, %v336
    %v354 = vpop.permute.xlu0 %353
    %355 = vset.pattern.permute.xlu0 0
    %356 = vperm.xlu0 %355, %v337
    %v357 = vpop.permute.xlu0 %356
    %358 = vset.pattern.permute.xlu0 0
    %359 = vperm.xlu0 %358, %v338
    %v360 = vpop.permute.xlu0 %359
    %361 = vset.pattern.permute.xlu0 0
    %362 = vperm.xlu0 %361, %v339
    %v363 = vpop.permute.xlu0 %362
    %364 = vset.pattern.permute.xlu0 0
    %365 = vperm.xlu0 %364, %v340
    %v366 = vpop.permute.xlu0 %365
    %367 = vset.pattern.permute.xlu0 0
    %368 = vperm.xlu0 %367, %v341
    %v369 = vpop.permute.xlu0 %368
    %370 = vset.pattern.permute.xlu0 0
    %371 = vperm.xlu0 %370, %v342
    %v372 = vpop.permute.xlu0 %371
    %373 = vset.pattern.permute.xlu0 0
    %374 = vperm.xlu0 %373, %v343
    %v375 = vpop.permute.xlu0 %374
    %v376 = vperm.slane %v354, %v218
    %v377 = vperm.slane %v357, %v218
    %v378 = vperm.slane %v360, %v218
    %v379 = vperm.slane %v363, %v218
    %v380 = vperm.slane %v366, %v218
    %v381 = vperm.slane %v369, %v218
    %v382 = vperm.slane %v372, %v218
    %v383 = vperm.slane %v375, %v218
    %vm384 = vcmask 1041409
    %v385 = vsel %vm384, %v377, %v376
    %vm386 = vcmask 1042434
    %v387 = vsel %vm386, %v378, %v385
    %vm388 = vcmask 1043459
    %v389 = vsel %vm388, %v379, %v387
    %vm390 = vcmask 1044484
    %v391 = vsel %vm390, %v380, %v389
    %vm392 = vcmask 1045509
    %v393 = vsel %vm392, %v381, %v391
    %vm394 = vcmask 1046534
    %v395 = vsel %vm394, %v382, %v393
    %vm396 = vcmask 1047559
    %v397 = vsel %vm396, %v383, %v395
    %v399 = vsel %vm231, %v397, 0.0
    %400 = vadd.xlane.f32.xlu0 %v399
    %v401 = vpop.xlane.xlu0 %400
    %v402 = vrot.slane %v401, 4
    %v403 = vadd.f32 %v401, %v402
    %v404 = vrot.slane %v403, 2
    %v405 = vadd.f32 %v403, %v404
    %v406 = vrot.slane %v405, 1
    %v407 = vadd.f32 %v405, %v406
    %s408 = vtos %v407
    %v409 = vstv %s408
    %v410 = vmul.f32 %v409, %v270
    %v411 = vmul.f32 %v214, %v243
    %v412 = vsel %vm231, %v411, 0.0
    %413 = vadd.xlane.f32.xlu0 %v412
    %v414 = vpop.xlane.xlu0 %413
    %v415 = vrot.slane %v414, 4
    %v416 = vadd.f32 %v414, %v415
    %v417 = vrot.slane %v416, 2
    %v418 = vadd.f32 %v416, %v417
    %v419 = vrot.slane %v418, 1
    %v420 = vadd.f32 %v418, %v419
    %s421 = vtos %v420
    %v422 = vstv %s421
    %v423 = vmul.f32 %v422, %v270
    %v424 = vsub.f32 %v122, %v410
    %v425 = vsub.f32 %v134, %v410
    %v426 = vsub.f32 %v146, %v410
    %v427 = vsub.f32 %v158, %v410
    %v428 = vsub.f32 %v170, %v410
    %v429 = vsub.f32 %v182, %v410
    %v430 = vsub.f32 %v194, %v410
    %v431 = vsub.f32 %v206, %v410
    %v432 = vmul.f32 %v424, %v278
    %v433 = vmul.f32 %v425, %v285
    %v434 = vmul.f32 %v426, %v292
    %v435 = vmul.f32 %v427, %v299
    %v436 = vmul.f32 %v428, %v306
    %v437 = vmul.f32 %v429, %v313
    %v438 = vmul.f32 %v430, %v320
    %v439 = vmul.f32 %v431, %v327
    %v440 = vsub.f32 %v214, %v423
    %v441 = vmul.f32 %v440, %v243
    %v443 = vperm.slane %v441, 0
    %v444 = vlaneseq
    %v445 = vshrl.u32 %v444, 7
    %447 = vset.pattern.permute.xlu0 %v445
    %448 = vperm.xlu0 %447, %v443
    %v449 = vpop.permute.xlu0 %448
    %v450 = vperm.slane %v441, 1
    %v451 = vlaneseq
    %v452 = vshrl.u32 %v451, 7
    %454 = vset.pattern.permute.xlu0 %v452
    %455 = vperm.xlu0 %454, %v450
    %v456 = vpop.permute.xlu0 %455
    %v457 = vperm.slane %v441, 2
    %v458 = vlaneseq
    %v459 = vshrl.u32 %v458, 7
    %461 = vset.pattern.permute.xlu0 %v459
    %462 = vperm.xlu0 %461, %v457
    %v463 = vpop.permute.xlu0 %462
    %v464 = vperm.slane %v441, 3
    %v465 = vlaneseq
    %v466 = vshrl.u32 %v465, 7
    %468 = vset.pattern.permute.xlu0 %v466
    %469 = vperm.xlu0 %468, %v464
    %v470 = vpop.permute.xlu0 %469
    %v471 = vperm.slane %v441, 4
    %v472 = vlaneseq
    %v473 = vshrl.u32 %v472, 7
    %475 = vset.pattern.permute.xlu0 %v473
    %476 = vperm.xlu0 %475, %v471
    %v477 = vpop.permute.xlu0 %476
    %v478 = vperm.slane %v441, 5
    %v479 = vlaneseq
    %v480 = vshrl.u32 %v479, 7
    %482 = vset.pattern.permute.xlu0 %v480
    %483 = vperm.xlu0 %482, %v478
    %v484 = vpop.permute.xlu0 %483
    %v485 = vperm.slane %v441, 6
    %v486 = vlaneseq
    %v487 = vshrl.u32 %v486, 7
    %489 = vset.pattern.permute.xlu0 %v487
    %490 = vperm.xlu0 %489, %v485
    %v491 = vpop.permute.xlu0 %490
    %v492 = vperm.slane %v441, 7
    %v493 = vlaneseq
    %v494 = vshrl.u32 %v493, 7
    %496 = vset.pattern.permute.xlu0 %v494
    %497 = vperm.xlu0 %496, %v492
    %v498 = vpop.permute.xlu0 %497
    %v507 = vmul.f32 %v432, %v449
    %v508 = vmul.f32 %v433, %v456
    %v509 = vmul.f32 %v434, %v463
    %v510 = vmul.f32 %v435, %v470
    %v511 = vmul.f32 %v436, %v477
    %v512 = vmul.f32 %v437, %v484
    %v513 = vmul.f32 %v438, %v491
    %v514 = vmul.f32 %v439, %v498
    %523 = vset.pattern.permute.xlu0 0
    %524 = vperm.xlu0 %523, %v507
    %v525 = vpop.permute.xlu0 %524
    %526 = vset.pattern.permute.xlu0 0
    %527 = vperm.xlu0 %526, %v508
    %v528 = vpop.permute.xlu0 %527
    %529 = vset.pattern.permute.xlu0 0
    %530 = vperm.xlu0 %529, %v509
    %v531 = vpop.permute.xlu0 %530
    %532 = vset.pattern.permute.xlu0 0
    %533 = vperm.xlu0 %532, %v510
    %v534 = vpop.permute.xlu0 %533
    %535 = vset.pattern.permute.xlu0 0
    %536 = vperm.xlu0 %535, %v511
    %v537 = vpop.permute.xlu0 %536
    %538 = vset.pattern.permute.xlu0 0
    %539 = vperm.xlu0 %538, %v512
    %v540 = vpop.permute.xlu0 %539
    %541 = vset.pattern.permute.xlu0 0
    %542 = vperm.xlu0 %541, %v513
    %v543 = vpop.permute.xlu0 %542
    %544 = vset.pattern.permute.xlu0 0
    %545 = vperm.xlu0 %544, %v514
    %v546 = vpop.permute.xlu0 %545
    %v547 = vperm.slane %v525, %v218
    %v548 = vperm.slane %v528, %v218
    %v549 = vperm.slane %v531, %v218
    %v550 = vperm.slane %v534, %v218
    %v551 = vperm.slane %v537, %v218
    %v552 = vperm.slane %v540, %v218
    %v553 = vperm.slane %v543, %v218
    %v554 = vperm.slane %v546, %v218
    %v555 = vsel %vm384, %v548, %v547
    %v556 = vsel %vm386, %v549, %v555
    %v557 = vsel %vm388, %v550, %v556
    %v558 = vsel %vm390, %v551, %v557
    %v559 = vsel %vm392, %v552, %v558
    %v560 = vsel %vm394, %v553, %v559
    %v561 = vsel %vm396, %v554, %v560
    %v563 = vsel %vm231, %v561, 0.0
    %564 = vadd.xlane.f32.xlu0 %v563
    %v565 = vpop.xlane.xlu0 %564
    %v566 = vrot.slane %v565, 4
    %v567 = vadd.f32 %v565, %v566
    %v568 = vrot.slane %v567, 2
    %v569 = vadd.f32 %v567, %v568
    %v570 = vrot.slane %v569, 1
    %v571 = vadd.f32 %v569, %v570
    %s572 = vtos %v571
    %v573 = vstv %s572
    %v574 = vmul.f32 %v432, %v432
    %v575 = vmul.f32 %v433, %v433
    %v576 = vmul.f32 %v434, %v434
    %v577 = vmul.f32 %v435, %v435
    %v578 = vmul.f32 %v436, %v436
    %v579 = vmul.f32 %v437, %v437
    %v580 = vmul.f32 %v438, %v438
    %v581 = vmul.f32 %v439, %v439
    %590 = vset.pattern.permute.xlu0 0
    %591 = vperm.xlu0 %590, %v574
    %v592 = vpop.permute.xlu0 %591
    %593 = vset.pattern.permute.xlu0 0
    %594 = vperm.xlu0 %593, %v575
    %v595 = vpop.permute.xlu0 %594
    %596 = vset.pattern.permute.xlu0 0
    %597 = vperm.xlu0 %596, %v576
    %v598 = vpop.permute.xlu0 %597
    %599 = vset.pattern.permute.xlu0 0
    %600 = vperm.xlu0 %599, %v577
    %v601 = vpop.permute.xlu0 %600
    %602 = vset.pattern.permute.xlu0 0
    %603 = vperm.xlu0 %602, %v578
    %v604 = vpop.permute.xlu0 %603
    %605 = vset.pattern.permute.xlu0 0
    %606 = vperm.xlu0 %605, %v579
    %v607 = vpop.permute.xlu0 %606
    %608 = vset.pattern.permute.xlu0 0
    %609 = vperm.xlu0 %608, %v580
    %v610 = vpop.permute.xlu0 %609
    %611 = vset.pattern.permute.xlu0 0
    %612 = vperm.xlu0 %611, %v581
    %v613 = vpop.permute.xlu0 %612
    %v614 = vperm.slane %v592, %v218
    %v615 = vperm.slane %v595, %v218
    %v616 = vperm.slane %v598, %v218
    %v617 = vperm.slane %v601, %v218
    %v618 = vperm.slane %v604, %v218
    %v619 = vperm.slane %v607, %v218
    %v620 = vperm.slane %v610, %v218
    %v621 = vperm.slane %v613, %v218
    %v622 = vsel %vm384, %v615, %v614
    %v623 = vsel %vm386, %v616, %v622
    %v624 = vsel %vm388, %v617, %v623
    %v625 = vsel %vm390, %v618, %v624
    %v626 = vsel %vm392, %v619, %v625
    %v627 = vsel %vm394, %v620, %v626
    %v628 = vsel %vm396, %v621, %v627
    %v630 = vsel %vm231, %v628, 0.0
    %631 = vadd.xlane.f32.xlu0 %v630
    %v632 = vpop.xlane.xlu0 %631
    %v633 = vrot.slane %v632, 4
    %v634 = vadd.f32 %v632, %v633
    %v635 = vrot.slane %v634, 2
    %v636 = vadd.f32 %v634, %v635
    %v637 = vrot.slane %v636, 1
    %v638 = vadd.f32 %v636, %v637
    %s639 = vtos %v638
    %v640 = vstv %s639
    %v641 = vmul.f32 %v441, %v441
    %v642 = vsel %vm231, %v641, 0.0
    %643 = vadd.xlane.f32.xlu0 %v642
    %v644 = vpop.xlane.xlu0 %643
    %v645 = vrot.slane %v644, 4
    %v646 = vadd.f32 %v644, %v645
    %v647 = vrot.slane %v646, 2
    %v648 = vadd.f32 %v646, %v647
    %v649 = vrot.slane %v648, 1
    %v650 = vadd.f32 %v648, %v649
    %s651 = vtos %v650
    %v652 = vstv %s651
    %v653 = vmul.f32 %v640, %v652
    %v654 = vrsqrt.pop %v653
    %v655 = vmul.f32 %v654, %v653
    %v656 = vmul.f32 %v655, %v654
    %v657 = vmul.f32 0.5, %v656
    %v658 = vsub.f32 1.5, %v657
    %v659 = vmul.f32 %v654, %v658
    %vm660 = vweird.f32 %v653
    %vm661 = vweird.f32 %v654
    %vm662 = vmor %vm660, %vm661
    %v663 = vsel %vm662, %v654, %v659
    %v664 = vmul.f32 %v573, %v663
    %v665 = vsub.f32 1.0, %v664
    %vm666 = vcmp.ne.f32.partialorder %v665, %v665
    %v667 = vsel %vm666, 1.0, %v665
    %vm668 = vcmask 0
    %669 = vst.msk [vmem:[#allocation2] sm:$0x1] %vm668, %v667
    // Predicated region
    $region18: #{cpcc_loss.3} parent=1 // pred_check
      _
    $region19: #{cpcc_loss.3} parent=1 // pred_check_branch
      %671 = sbr.rel (0) target = $region21
    $region20: #{cpcc_loss.3} parent=1 // pred_region
      %673 = vsyncadd [#allocation3], 0
      %s675 = sshll.u32 [#allocation2], 4
      %s676 = int_to_ptr.vmem [resolvable:$true] %s675
      %s677 = sshll.u32 %s4, 4
      %s678 = int_to_ptr.hbm [resolvable:$true] %s677
      %680 = dma.vmem_to_hbm [thread:$0]  %s676, 16, %s678, [#allocation3]
    $region21: #{cpcc_loss.3} parent=1 // pred_fallthru
      _
    // Predicated region
    $region22: #{cpcc_loss.3} parent=1 // pred_check
      _
    $region23: #{cpcc_loss.3} parent=1 // pred_check_branch
      %682 = sbr.rel (0) target = $region25
    $region24: #{cpcc_loss.3} parent=1 // pred_region
      %684 = dma.done [#allocation3], 16
    $region25: #{cpcc_loss.3} parent=1 // pred_fallthru
      _
    %685 = vsyncpa [#allocation3], 1

</llo_original>
